<compile_context>
chip_gen: v5e
topology: v5e:2x2
jax: 0.10.0
libtpu: 0.0.40
codegen_flags: <defaults>
</compile_context>

<pallas_src>
import functools
import math
from typing import NamedTuple

import jax
import jax.numpy as jnp
from jax.experimental import pallas as pl
from jax.experimental.pallas import tpu as pltpu


_LANE = 128                         # TPU lane width: channel padding target
_BN_EPS = 1e-5
_TILE_BUDGET = 8 * 1024 * 1024      # byte budget for the th-dependent working set


def _round_up(v, m):
    return (v + m - 1) // m * m


def _cpad(c):
    return _round_up(max(c, 1), _LANE)


@functools.lru_cache(maxsize=None)
def _vmem_limit_bytes():
    """Generation-aware scoped-VMEM ceiling (3/4 of physical, 48 MiB fallback)."""
    try:
        cap = pltpu.get_tpu_info().vmem_capacity_bytes
        return int(min(cap * 3 // 4, 100 * 1024 * 1024))
    except Exception:
        return 48 * 1024 * 1024


def _pick_row_tile(ho, wo, wp, cin, ct, stride):
    """Largest divisor of ho whose th-dependent working set fits the byte budget."""
    # TODO(synk): allow ragged row tiles (pl.cdiv grid + masking) instead of
    #   requiring ho % th == 0.
    best = 1
    for th in range(1, ho + 1):
        if ho % th:
            continue
        win = (th - 1) * stride + 1
        acc_b = th * wo * ct * 4                                 # f32 accumulator value
        full_b = th * wp * ct * 4 if stride == 1 else 0          # full-width partial (f32)
        wind_b = (th if stride == 1 else win) * wp * cin * 2     # bf16 row window
        out_b = 2 * th * wo * ct * 2                             # double-buffered out tile
        if acc_b + full_b + wind_b + out_b <= _TILE_BUDGET:
            best = th
    return best


class ConvCfg(NamedTuple):
    k: int
    stride: int
    pad: int
    act: bool


# ---------------------------------------------------------------------------
# Pallas kernel: fused conv (KxK, stride 1/2) + folded-BN affine + LeakyReLU(0.1)
# ---------------------------------------------------------------------------
def _conv_bn_act_kernel(x_ref, w_ref, s_ref, b_ref, o_ref, *,
                        kh, kw, stride, th, wo, apply_act):
    # x_ref : (1, Hp, Wp, Cin)   padded input image (bf16), Wp % 16 == 0
    # w_ref : (kh*kw, Cin, CT)   bf16 weight slab for the current Cout tile
    # s_ref : (1, CT) f32        folded BN scale
    # b_ref : (1, CT) f32        folded BN bias (or conv bias)
    # o_ref : (1, th, Wo, CT)    bf16 output row tile
    wp = x_ref.shape[2]
    cin = x_ref.shape[3]
    ct = o_ref.shape[3]

    r = pl.program_id(2)                      # row-tile index (innermost grid axis)
    row0 = r * (th * stride)

    acc = None                                # (th, wo, ct) f32 value accumulator

    if stride == 1:
        # Column-tap outer / row-tap inner: the full-width partial sum for a
        # given j is shifted + sliced only once (kw shifts instead of kh*kw).
        for j in range(kw):
            pj = None                         # (th*wp, ct) f32 full-width partial
            for i in range(kh):
                rows2d = x_ref[0, pl.ds(row0 + i, th), :, :].reshape(th * wp, cin)
                part = jnp.dot(rows2d, w_ref[i * kw + j],
                               preferred_element_type=jnp.float32)
                pj = part if pj is None else pj + part
            contrib = pj.reshape(th, wp, ct)[:, j:j + wo, :]
            acc = contrib if acc is None else acc + contrib
    else:
        # In-kernel stride: subsample rows (major dim) and columns per tap.
        # TODO(synk): strided pl.ds loads straight from x_ref would push the
        #   subsampling into vld addressing instead of vreg relayouts.
        win = (th - 1) * stride + 1
        wlim = stride * (wo - 1) + 1
        for i in range(kh):
            window = x_ref[0, pl.ds(row0 + i, win), :, :]        # (win, Wp, Cin)
            rows = window[::stride]                              # (th, Wp, Cin)
            for j in range(kw):
                patch = rows[:, j:j + wlim:stride, :]            # (th, Wo, Cin)
                part = jnp.dot(patch.reshape(th * wo, cin), w_ref[i * kw + j],
                               preferred_element_type=jnp.float32)
                part = part.reshape(th, wo, ct)
                acc = part if acc is None else acc + part

    y = acc * s_ref[0] + b_ref[0]                                # f32 epilogue
    if apply_act:
        y = jnp.where(y > 0.0, y, 0.1 * y)                       # leaky_relu(0.1)
    o_ref[0] = y.astype(o_ref.dtype)


def conv_bn_act(x, w, scale, bias, *, stride, padding, apply_act):
    """x: (N,H,W,Cin_pad) bf16; w: (kh,kw,Cin_pad,Cout_pad) bf16;
    scale/bias: (1,Cout_pad) f32. Returns (N,Ho,Wo,Cout_pad) bf16."""
    n, h, w_in, cin = x.shape
    kh, kw, cin_w, cout = w.shape
    assert cin == cin_w, (cin, cin_w)
    assert cin % _LANE == 0 and cout % _LANE == 0

    hp = h + 2 * padding
    wp_valid = w_in + 2 * padding
    ho = (hp - kh) // stride + 1
    wo = (wp_valid - kw) // stride + 1
    wp = _round_up(wp_valid, 16)          # 16-aligned width (free bf16 flatten)

    xp = jnp.pad(x, ((0, 0), (padding, padding),
                     (padding, wp - w_in - padding), (0, 0)))

    ct = 256 if cout % 256 == 0 else _LANE    # full MXU output width on v6e/v7x
    th = _pick_row_tile(ho, wo, wp, cin, ct, stride)
    w_flat = w.reshape(kh * kw, cin, cout)

    kernel = functools.partial(_conv_bn_act_kernel, kh=kh, kw=kw, stride=stride,
                               th=th, wo=wo, apply_act=apply_act)
    # Row-tile axis innermost: the bf16 weight slab (index depends only on co)
    # stays resident across all ho//th row tiles.
    grid = (n, cout // ct, ho // th)

    return pl.pallas_call(
        kernel,
        out_shape=jax.ShapeDtypeStruct((n, ho, wo, cout), jnp.bfloat16),
        grid=grid,
        in_specs=[
            # TODO(synk): halo row tiling instead of staging the whole padded
            #   image (needed for real resolutions on 64 MiB-VMEM parts).
            pl.BlockSpec((1, hp, wp, cin), lambda b, co, r: (b, 0, 0, 0)),
            pl.BlockSpec((kh * kw, cin, ct), lambda b, co, r: (0, 0, co)),
            pl.BlockSpec((1, ct), lambda b, co, r: (0, co)),
            pl.BlockSpec((1, ct), lambda b, co, r: (0, co)),
        ],
        out_specs=pl.BlockSpec((1, th, wo, ct), lambda b, co, r: (b, r, 0, co)),
        compiler_params=pltpu.CompilerParams(
            dimension_semantics=("parallel", "parallel", "parallel"),
            vmem_limit_bytes=_vmem_limit_bytes()),
    )(xp, w_flat, scale, bias)


def apply_layer(p, cfg, x):
    return conv_bn_act(x, p["w"], p["scale"], p["bias"],
                       stride=cfg.stride, padding=cfg.pad, apply_act=cfg.act)


def upsample2_nearest(x):
    # F.upsample(scale_factor=2, mode='nearest') on NHWC
    return jnp.repeat(jnp.repeat(x, 2, axis=1), 2, axis=2)


# ---------------------------------------------------------------------------
# Deterministic parameter construction (synthetic init, mirrors weights_init),
# with channels padded to 128 lanes and weights stored in bf16.
# Static layer configs (ints) are kept separate from the traced array params.
# ---------------------------------------------------------------------------
def _init_conv(key, cin_segs, cout, k, *, stride=1, bn=True):
    """cin_segs: list of *real* input-channel widths whose 128-padded concat
    forms the actual kernel input (handles torch.cat along channels)."""
    fan_out = cout * k * k
    std = math.sqrt(2.0 / fan_out)
    cout_p = _cpad(cout)
    blocks = []
    for c in cin_segs:
        key, sub = jax.random.split(key)
        wr = jax.random.normal(sub, (k, k, c, cout), jnp.float32) * std
        blk = jnp.zeros((k, k, _cpad(c), cout_p), jnp.float32)
        blk = blk.at[:, :, :c, :cout].set(wr)
        blocks.append(blk)
    w = jnp.concatenate(blocks, axis=2).astype(jnp.bfloat16)
    if bn:
        # BN folded with gamma=1, beta=0, mean=0, var=1 (inference-mode stats)
        scale = jnp.full((1, cout_p), 1.0 / math.sqrt(1.0 + _BN_EPS), jnp.float32)
    else:
        scale = jnp.ones((1, cout_p), jnp.float32)
    bias = jnp.zeros((1, cout_p), jnp.float32)
    params = dict(w=w, scale=scale, bias=bias)
    cfg = ConvCfg(k=k, stride=stride, pad=(k - 1) // 2, act=bn)
    return params, cfg


def build_yolov3(key, num_classes, div):
    cs = lambda c: max(c // div, 1)       # channel down-scaling for a small test
    det_c = (5 + num_classes) * 3
    ki = iter(jax.random.split(key, 40))
    P, C = {}, {}

    # --- extractor stand-in (TODO(synk): Darknet53 body not provided) ---
    P["stem"], C["stem"] = _init_conv(next(ki), [3], cs(32), 3)
    down_chs = [(cs(32), cs(64)), (cs(64), cs(128)), (cs(128), cs(256)),
                (cs(256), cs(512)), (cs(512), cs(1024))]
    P["down"], C["down"] = [], []
    for a, b in down_chs:
        p, c = _init_conv(next(ki), [a], b, 3, stride=2)
        P["down"].append(p); C["down"].append(c)

    def head(spec, first_segs):
        ps, cf = [], []
        for idx, (a, b, k) in enumerate(spec):
            segs = first_segs if idx == 0 else [cs(a)]
            p, c = _init_conv(next(ki), segs, cs(b), k)
            ps.append(p); cf.append(c)
        return ps, cf

    spec1 = [(1024, 512, 1), (512, 1024, 3), (1024, 512, 1),
             (512, 1024, 3), (1024, 512, 1), (512, 1024, 3)]
    P["list1"], C["list1"] = head(spec1, [cs(1024)])
    p, c = _init_conv(next(ki), [cs(1024)], det_c, 1, bn=False)
    P["list1"].append(p); C["list1"].append(c)
    P["smooth1"], C["smooth1"] = _init_conv(next(ki), [cs(512)], cs(256), 1)

    spec2 = [(768, 256, 1), (256, 512, 3), (512, 256, 1),
             (256, 512, 3), (512, 256, 1), (256, 512, 3)]
    P["list2"], C["list2"] = head(spec2, [cs(256), cs(512)])   # cat(smooth1, c4)
    p, c = _init_conv(next(ki), [cs(512)], det_c, 1, bn=False)
    P["list2"].append(p); C["list2"].append(c)
    P["smooth2"], C["smooth2"] = _init_conv(next(ki), [cs(256)], cs(128), 1)

    spec3 = [(384, 128, 1), (128, 256, 3), (256, 128, 1),
             (128, 256, 3), (256, 128, 1), (128, 256, 3)]
    P["list3"], C["list3"] = head(spec3, [cs(128), cs(256)])   # cat(smooth2, c3)
    p, c = _init_conv(next(ki), [cs(256)], det_c, 1, bn=False)
    P["list3"].append(p); C["list3"].append(c)
    return P, C


# ---------------------------------------------------------------------------
# Forward pass (phase == 'train': returns (out1, out2, out3))
# ---------------------------------------------------------------------------
def extractor_forward(P, C, x):
    x = apply_layer(P["stem"], C["stem"], x)
    feats = []
    for p, c in zip(P["down"], C["down"]):
        x = apply_layer(p, c, x)          # stride-2 handled inside the kernel
        feats.append(x)
    return feats[2], feats[3], feats[4]


def yolov3_forward(params, x_nchw, *, cfgs, det_c):
    x = jnp.transpose(x_nchw, (0, 2, 3, 1)).astype(jnp.bfloat16)  # NCHW -> NHWC
    c = x.shape[-1]
    # TODO(synk): the stem pads Cin=3 -> 128 lanes; an im2col (K=27) stem would
    #   avoid the ~42x K-inflation at real resolutions.
    x = jnp.pad(x, ((0, 0), (0, 0), (0, 0), (0, _cpad(c) - c)))   # lane-pad C
    c3, c4, c5 = extractor_forward(params, cfgs, x)

    x = c5
    for i in range(5):
        x = apply_layer(params["list1"][i], cfgs["list1"][i], x)
    smt1 = apply_layer(params["smooth1"], cfgs["smooth1"], x)
    # TODO(synk): fuse upsample+concat into the first 1x1 conv of the next head
    #   (two-input BlockSpecs with r//2 row index) to skip one HBM round trip.
    smt1 = upsample2_nearest(smt1)
    smt1 = jnp.concatenate([smt1, c4], axis=-1)      # torch.cat dim=1 (channels)
    for i in range(5, 7):
        x = apply_layer(params["list1"][i], cfgs["list1"][i], x)
    out1 = x

    x = smt1
    for i in range(5):
        x = apply_layer(params["list2"][i], cfgs["list2"][i], x)
    smt2 = apply_layer(params["smooth2"], cfgs["smooth2"], x)
    smt2 = upsample2_nearest(smt2)
    smt2 = jnp.concatenate([smt2, c3], axis=-1)
    for i in range(5, 7):
        x = apply_layer(params["list2"][i], cfgs["list2"][i], x)
    out2 = x

    x = smt2
    for i in range(7):
        x = apply_layer(params["list3"][i], cfgs["list3"][i], x)
    out3 = x

    def finish(o):  # crop lane padding, back to PyTorch NCHW / f32
        return jnp.transpose(o[..., :det_c].astype(jnp.float32), (0, 3, 1, 2))

    return finish(out1), finish(out2), finish(out3)


# ---------------------------------------------------------------------------
# Small self-check of the fused conv kernel against lax.conv_general_dilated
# ---------------------------------------------------------------------------
def _reference_conv_bn_act(x, p, cfg):
    y = jax.lax.conv_general_dilated(
        x.astype(jnp.float32), p["w"].astype(jnp.float32),
        window_strides=(cfg.stride, cfg.stride),
        padding=[(cfg.pad, cfg.pad)] * 2,
        dimension_numbers=("NHWC", "HWIO", "NHWC"),
        precision=jax.lax.Precision.HIGHEST)
    y = y * p["scale"][0] + p["bias"][0]
    if cfg.act:
        y = jnp.where(y > 0, y, 0.1 * y)
    return y


def _check_conv_correctness():
    key = jax.random.PRNGKey(1)
    kx, k1, k2, k3 = jax.random.split(key, 4)
    cin, cout = 8, 24
    xr = jax.random.normal(kx, (2, 12, 12, cin), jnp.float32)
    x = jnp.pad(xr, ((0, 0), (0, 0), (0, 0),
                     (0, _cpad(cin) - cin))).astype(jnp.bfloat16)
    tests = (_init_conv(k1, [cin], cout, 3, stride=1),
             _init_conv(k2, [cin], cout, 3, stride=2),
             _init_conv(k3, [cin], cout, 1, stride=1, bn=False))
    for p, cfg in tests:
        got = apply_layer(p, cfg, x).astype(jnp.float32)
        ref = _reference_conv_bn_act(x, p, cfg)
        assert got.shape == ref.shape, (got.shape, ref.shape)
        err = float(jnp.max(jnp.abs(got - ref)))
        assert err < 2e-2, ("conv mismatch", err)


# ---------------------------------------------------------------------------
if __name__ == "__main__":
    NUM_CLASSES = 3          # -> (5 + 3) * 3 = 24 prediction channels
    DIV = 16                 # channel width divisor (1024 -> 64, etc.)
    N, H, W = 2, 64, 64      # input: NCHW, RGB
    det_c = (5 + NUM_CLASSES) * 3

    _check_conv_correctness()

    key = jax.random.PRNGKey(0)
    pkey, xkey = jax.random.split(key)
    params, cfgs = build_yolov3(pkey, NUM_CLASSES, DIV)
    x = jax.random.normal(xkey, (N, 3, H, W), jnp.float32)  # NCHW like PyTorch

    # Static layer configs (Python ints) are closed over; only arrays are traced.
    fwd = jax.jit(functools.partial(yolov3_forward, cfgs=cfgs, det_c=det_c))
    out1, out2, out3 = fwd(params, x)
    jax.block_until_ready((out1, out2, out3))

    assert out1.shape == (N, det_c, H // 32, W // 32), out1.shape
    assert out2.shape == (N, det_c, H // 16, W // 16), out2.shape
    assert out3.shape == (N, det_c, H // 8, W // 8), out3.shape
    assert all(bool(jnp.all(jnp.isfinite(o))) for o in (out1, out2, out3))

    print("KERNEL_OK")
</pallas_src>

<mosaic_0001>
module attributes {stable_mosaic.version = 11 : i64} {
  func.func @_conv_bn_act_kernel(%arg0: i32, %arg1: i32, %arg2: i32, %arg3: memref<1x14x16x128xbf16, #tpu.memory_space<vmem>>, %arg4: memref<9x128x128xbf16, #tpu.memory_space<vmem>>, %arg5: memref<1x128xf32, #tpu.memory_space<vmem>>, %arg6: memref<1x128xf32, #tpu.memory_space<vmem>>, %arg7: memref<1x12x12x128xbf16, #tpu.memory_space<vmem>>) attributes {dimension_semantics = [#tpu.dimension_semantics<parallel>, #tpu.dimension_semantics<parallel>, #tpu.dimension_semantics<parallel>], iteration_bounds = array<i64: 2, 1, 1>, scalar_prefetch = 0 : i64, scratch_operands = 0 : i64, tpu.core_type = #tpu.core_type<tc>, window_params = [{transform_indices = @transform_0, window_bounds = array<i64: 1, 14, 16, 128>}, {transform_indices = @transform_1, window_bounds = array<i64: 9, 128, 128>}, {transform_indices = @transform_2, window_bounds = array<i64: 1, 128>}, {transform_indices = @transform_3, window_bounds = array<i64: 1, 128>}, {transform_indices = @transform_4, window_bounds = array<i64: 1, 12, 12, 128>}]} {
    %c12_i32 = arith.constant 12 : i32
    %0 = arith.muli %arg2, %c12_i32 : i32
    %c0_i32 = arith.constant 0 : i32
    %1 = arith.addi %0, %c0_i32 : i32
    %c0 = arith.constant 0 : index
    %2 = arith.index_cast %1 : i32 to index
    %c0_0 = arith.constant 0 : index
    %c0_1 = arith.constant 0 : index
    %3 = vector.load %arg3[%c0, %2, %c0_0, %c0_1] : memref<1x14x16x128xbf16, #tpu.memory_space<vmem>>, vector<1x12x16x128xbf16>
    %4 = vector.shape_cast %3 : vector<1x12x16x128xbf16> to vector<12x16x128xbf16>
    %5 = vector.shape_cast %4 : vector<12x16x128xbf16> to vector<192x128xbf16>
    %c0_2 = arith.constant 0 : index
    %c0_3 = arith.constant 0 : index
    %c0_4 = arith.constant 0 : index
    %6 = vector.load %arg4[%c0_2, %c0_3, %c0_4] : memref<9x128x128xbf16, #tpu.memory_space<vmem>>, vector<1x128x128xbf16>
    %7 = vector.shape_cast %6 : vector<1x128x128xbf16> to vector<128x128xbf16>
    %cst = arith.constant dense<0.000000e+00> : vector<192x128xf32>
    %8 = tpu.matmul %5, %7, %cst {dimension_numbers = #tpu.dot_dimension_numbers<[1], [0], [0], [1], [0, 0, 1, 1], [], []>} : vector<192x128xbf16>, vector<128x128xbf16>, vector<192x128xf32> -> vector<192x128xf32>
    %c1_i32 = arith.constant 1 : i32
    %9 = arith.addi %0, %c1_i32 : i32
    %c0_5 = arith.constant 0 : index
    %10 = arith.index_cast %9 : i32 to index
    %c0_6 = arith.constant 0 : index
    %c0_7 = arith.constant 0 : index
    %11 = vector.load %arg3[%c0_5, %10, %c0_6, %c0_7] : memref<1x14x16x128xbf16, #tpu.memory_space<vmem>>, vector<1x12x16x128xbf16>
    %12 = vector.shape_cast %11 : vector<1x12x16x128xbf16> to vector<12x16x128xbf16>
    %13 = vector.shape_cast %12 : vector<12x16x128xbf16> to vector<192x128xbf16>
    %c3 = arith.constant 3 : index
    %c0_8 = arith.constant 0 : index
    %c0_9 = arith.constant 0 : index
    %14 = vector.load %arg4[%c3, %c0_8, %c0_9] : memref<9x128x128xbf16, #tpu.memory_space<vmem>>, vector<1x128x128xbf16>
    %15 = vector.shape_cast %14 : vector<1x128x128xbf16> to vector<128x128xbf16>
    %cst_10 = arith.constant dense<0.000000e+00> : vector<192x128xf32>
    %16 = tpu.matmul %13, %15, %cst_10 {dimension_numbers = #tpu.dot_dimension_numbers<[1], [0], [0], [1], [0, 0, 1, 1], [], []>} : vector<192x128xbf16>, vector<128x128xbf16>, vector<192x128xf32> -> vector<192x128xf32>
    %17 = arith.addf %8, %16 : vector<192x128xf32>
    %c2_i32 = arith.constant 2 : i32
    %18 = arith.addi %0, %c2_i32 : i32
    %c0_11 = arith.constant 0 : index
    %19 = arith.index_cast %18 : i32 to index
    %c0_12 = arith.constant 0 : index
    %c0_13 = arith.constant 0 : index
    %20 = vector.load %arg3[%c0_11, %19, %c0_12, %c0_13] : memref<1x14x16x128xbf16, #tpu.memory_space<vmem>>, vector<1x12x16x128xbf16>
    %21 = vector.shape_cast %20 : vector<1x12x16x128xbf16> to vector<12x16x128xbf16>
    %22 = vector.shape_cast %21 : vector<12x16x128xbf16> to vector<192x128xbf16>
    %c6 = arith.constant 6 : index
    %c0_14 = arith.constant 0 : index
    %c0_15 = arith.constant 0 : index
    %23 = vector.load %arg4[%c6, %c0_14, %c0_15] : memref<9x128x128xbf16, #tpu.memory_space<vmem>>, vector<1x128x128xbf16>
    %24 = vector.shape_cast %23 : vector<1x128x128xbf16> to vector<128x128xbf16>
    %cst_16 = arith.constant dense<0.000000e+00> : vector<192x128xf32>
    %25 = tpu.matmul %22, %24, %cst_16 {dimension_numbers = #tpu.dot_dimension_numbers<[1], [0], [0], [1], [0, 0, 1, 1], [], []>} : vector<192x128xbf16>, vector<128x128xbf16>, vector<192x128xf32> -> vector<192x128xf32>
    %26 = arith.addf %17, %25 : vector<192x128xf32>
    %27 = vector.shape_cast %26 : vector<192x128xf32> to vector<12x16x128xf32>
    %28 = vector.extract_strided_slice %27 {offsets = [0, 0, 0], sizes = [12, 12, 128], strides = [1, 1, 1]} : vector<12x16x128xf32> to vector<12x12x128xf32>
    %c0_i32_17 = arith.constant 0 : i32
    %29 = arith.addi %0, %c0_i32_17 : i32
    %c0_18 = arith.constant 0 : index
    %30 = arith.index_cast %29 : i32 to index
    %c0_19 = arith.constant 0 : index
    %c0_20 = arith.constant 0 : index
    %31 = vector.load %arg3[%c0_18, %30, %c0_19, %c0_20] : memref<1x14x16x128xbf16, #tpu.memory_space<vmem>>, vector<1x12x16x128xbf16>
    %32 = vector.shape_cast %31 : vector<1x12x16x128xbf16> to vector<12x16x128xbf16>
    %33 = vector.shape_cast %32 : vector<12x16x128xbf16> to vector<192x128xbf16>
    %c1 = arith.constant 1 : index
    %c0_21 = arith.constant 0 : index
    %c0_22 = arith.constant 0 : index
    %34 = vector.load %arg4[%c1, %c0_21, %c0_22] : memref<9x128x128xbf16, #tpu.memory_space<vmem>>, vector<1x128x128xbf16>
    %35 = vector.shape_cast %34 : vector<1x128x128xbf16> to vector<128x128xbf16>
    %cst_23 = arith.constant dense<0.000000e+00> : vector<192x128xf32>
    %36 = tpu.matmul %33, %35, %cst_23 {dimension_numbers = #tpu.dot_dimension_numbers<[1], [0], [0], [1], [0, 0, 1, 1], [], []>} : vector<192x128xbf16>, vector<128x128xbf16>, vector<192x128xf32> -> vector<192x128xf32>
    %c1_i32_24 = arith.constant 1 : i32
    %37 = arith.addi %0, %c1_i32_24 : i32
    %c0_25 = arith.constant 0 : index
    %38 = arith.index_cast %37 : i32 to index
    %c0_26 = arith.constant 0 : index
    %c0_27 = arith.constant 0 : index
    %39 = vector.load %arg3[%c0_25, %38, %c0_26, %c0_27] : memref<1x14x16x128xbf16, #tpu.memory_space<vmem>>, vector<1x12x16x128xbf16>
    %40 = vector.shape_cast %39 : vector<1x12x16x128xbf16> to vector<12x16x128xbf16>
    %41 = vector.shape_cast %40 : vector<12x16x128xbf16> to vector<192x128xbf16>
    %c4 = arith.constant 4 : index
    %c0_28 = arith.constant 0 : index
    %c0_29 = arith.constant 0 : index
    %42 = vector.load %arg4[%c4, %c0_28, %c0_29] : memref<9x128x128xbf16, #tpu.memory_space<vmem>>, vector<1x128x128xbf16>
    %43 = vector.shape_cast %42 : vector<1x128x128xbf16> to vector<128x128xbf16>
    %cst_30 = arith.constant dense<0.000000e+00> : vector<192x128xf32>
    %44 = tpu.matmul %41, %43, %cst_30 {dimension_numbers = #tpu.dot_dimension_numbers<[1], [0], [0], [1], [0, 0, 1, 1], [], []>} : vector<192x128xbf16>, vector<128x128xbf16>, vector<192x128xf32> -> vector<192x128xf32>
    %45 = arith.addf %36, %44 : vector<192x128xf32>
    %c2_i32_31 = arith.constant 2 : i32
    %46 = arith.addi %0, %c2_i32_31 : i32
    %c0_32 = arith.constant 0 : index
    %47 = arith.index_cast %46 : i32 to index
    %c0_33 = arith.constant 0 : index
    %c0_34 = arith.constant 0 : index
    %48 = vector.load %arg3[%c0_32, %47, %c0_33, %c0_34] : memref<1x14x16x128xbf16, #tpu.memory_space<vmem>>, vector<1x12x16x128xbf16>
    %49 = vector.shape_cast %48 : vector<1x12x16x128xbf16> to vector<12x16x128xbf16>
    %50 = vector.shape_cast %49 : vector<12x16x128xbf16> to vector<192x128xbf16>
    %c7 = arith.constant 7 : index
    %c0_35 = arith.constant 0 : index
    %c0_36 = arith.constant 0 : index
    %51 = vector.load %arg4[%c7, %c0_35, %c0_36] : memref<9x128x128xbf16, #tpu.memory_space<vmem>>, vector<1x128x128xbf16>
    %52 = vector.shape_cast %51 : vector<1x128x128xbf16> to vector<128x128xbf16>
    %cst_37 = arith.constant dense<0.000000e+00> : vector<192x128xf32>
    %53 = tpu.matmul %50, %52, %cst_37 {dimension_numbers = #tpu.dot_dimension_numbers<[1], [0], [0], [1], [0, 0, 1, 1], [], []>} : vector<192x128xbf16>, vector<128x128xbf16>, vector<192x128xf32> -> vector<192x128xf32>
    %54 = arith.addf %45, %53 : vector<192x128xf32>
    %55 = vector.shape_cast %54 : vector<192x128xf32> to vector<12x16x128xf32>
    %56 = vector.extract_strided_slice %55 {offsets = [0, 1, 0], sizes = [12, 12, 128], strides = [1, 1, 1]} : vector<12x16x128xf32> to vector<12x12x128xf32>
    %57 = arith.addf %28, %56 : vector<12x12x128xf32>
    %c0_i32_38 = arith.constant 0 : i32
    %58 = arith.addi %0, %c0_i32_38 : i32
    %c0_39 = arith.constant 0 : index
    %59 = arith.index_cast %58 : i32 to index
    %c0_40 = arith.constant 0 : index
    %c0_41 = arith.constant 0 : index
    %60 = vector.load %arg3[%c0_39, %59, %c0_40, %c0_41] : memref<1x14x16x128xbf16, #tpu.memory_space<vmem>>, vector<1x12x16x128xbf16>
    %61 = vector.shape_cast %60 : vector<1x12x16x128xbf16> to vector<12x16x128xbf16>
    %62 = vector.shape_cast %61 : vector<12x16x128xbf16> to vector<192x128xbf16>
    %c2 = arith.constant 2 : index
    %c0_42 = arith.constant 0 : index
    %c0_43 = arith.constant 0 : index
    %63 = vector.load %arg4[%c2, %c0_42, %c0_43] : memref<9x128x128xbf16, #tpu.memory_space<vmem>>, vector<1x128x128xbf16>
    %64 = vector.shape_cast %63 : vector<1x128x128xbf16> to vector<128x128xbf16>
    %cst_44 = arith.constant dense<0.000000e+00> : vector<192x128xf32>
    %65 = tpu.matmul %62, %64, %cst_44 {dimension_numbers = #tpu.dot_dimension_numbers<[1], [0], [0], [1], [0, 0, 1, 1], [], []>} : vector<192x128xbf16>, vector<128x128xbf16>, vector<192x128xf32> -> vector<192x128xf32>
    %c1_i32_45 = arith.constant 1 : i32
    %66 = arith.addi %0, %c1_i32_45 : i32
    %c0_46 = arith.constant 0 : index
    %67 = arith.index_cast %66 : i32 to index
    %c0_47 = arith.constant 0 : index
    %c0_48 = arith.constant 0 : index
    %68 = vector.load %arg3[%c0_46, %67, %c0_47, %c0_48] : memref<1x14x16x128xbf16, #tpu.memory_space<vmem>>, vector<1x12x16x128xbf16>
    %69 = vector.shape_cast %68 : vector<1x12x16x128xbf16> to vector<12x16x128xbf16>
    %70 = vector.shape_cast %69 : vector<12x16x128xbf16> to vector<192x128xbf16>
    %c5 = arith.constant 5 : index
    %c0_49 = arith.constant 0 : index
    %c0_50 = arith.constant 0 : index
    %71 = vector.load %arg4[%c5, %c0_49, %c0_50] : memref<9x128x128xbf16, #tpu.memory_space<vmem>>, vector<1x128x128xbf16>
    %72 = vector.shape_cast %71 : vector<1x128x128xbf16> to vector<128x128xbf16>
    %cst_51 = arith.constant dense<0.000000e+00> : vector<192x128xf32>
    %73 = tpu.matmul %70, %72, %cst_51 {dimension_numbers = #tpu.dot_dimension_numbers<[1], [0], [0], [1], [0, 0, 1, 1], [], []>} : vector<192x128xbf16>, vector<128x128xbf16>, vector<192x128xf32> -> vector<192x128xf32>
    %74 = arith.addf %65, %73 : vector<192x128xf32>
    %c2_i32_52 = arith.constant 2 : i32
    %75 = arith.addi %0, %c2_i32_52 : i32
    %c0_53 = arith.constant 0 : index
    %76 = arith.index_cast %75 : i32 to index
    %c0_54 = arith.constant 0 : index
    %c0_55 = arith.constant 0 : index
    %77 = vector.load %arg3[%c0_53, %76, %c0_54, %c0_55] : memref<1x14x16x128xbf16, #tpu.memory_space<vmem>>, vector<1x12x16x128xbf16>
    %78 = vector.shape_cast %77 : vector<1x12x16x128xbf16> to vector<12x16x128xbf16>
    %79 = vector.shape_cast %78 : vector<12x16x128xbf16> to vector<192x128xbf16>
    %c8 = arith.constant 8 : index
    %c0_56 = arith.constant 0 : index
    %c0_57 = arith.constant 0 : index
    %80 = vector.load %arg4[%c8, %c0_56, %c0_57] : memref<9x128x128xbf16, #tpu.memory_space<vmem>>, vector<1x128x128xbf16>
    %81 = vector.shape_cast %80 : vector<1x128x128xbf16> to vector<128x128xbf16>
    %cst_58 = arith.constant dense<0.000000e+00> : vector<192x128xf32>
    %82 = tpu.matmul %79, %81, %cst_58 {dimension_numbers = #tpu.dot_dimension_numbers<[1], [0], [0], [1], [0, 0, 1, 1], [], []>} : vector<192x128xbf16>, vector<128x128xbf16>, vector<192x128xf32> -> vector<192x128xf32>
    %83 = arith.addf %74, %82 : vector<192x128xf32>
    %84 = vector.shape_cast %83 : vector<192x128xf32> to vector<12x16x128xf32>
    %85 = vector.extract_strided_slice %84 {offsets = [0, 2, 0], sizes = [12, 12, 128], strides = [1, 1, 1]} : vector<12x16x128xf32> to vector<12x12x128xf32>
    %86 = arith.addf %57, %85 : vector<12x12x128xf32>
    %c0_59 = arith.constant 0 : index
    %c0_60 = arith.constant 0 : index
    %87 = vector.load %arg5[%c0_59, %c0_60] : memref<1x128xf32, #tpu.memory_space<vmem>>, vector<1x128xf32>
    %88 = vector.shape_cast %87 : vector<1x128xf32> to vector<128xf32>
    %89 = vector.shape_cast %88 : vector<128xf32> to vector<1x1x128xf32>
    %90 = vector.broadcast %89 : vector<1x1x128xf32> to vector<12x12x128xf32>
    %91 = arith.mulf %86, %90 : vector<12x12x128xf32>
    %c0_61 = arith.constant 0 : index
    %c0_62 = arith.constant 0 : index
    %92 = vector.load %arg6[%c0_61, %c0_62] : memref<1x128xf32, #tpu.memory_space<vmem>>, vector<1x128xf32>
    %93 = vector.shape_cast %92 : vector<1x128xf32> to vector<128xf32>
    %94 = vector.shape_cast %93 : vector<128xf32> to vector<1x1x128xf32>
    %95 = vector.broadcast %94 : vector<1x1x128xf32> to vector<12x12x128xf32>
    %96 = arith.addf %91, %95 : vector<12x12x128xf32>
    %cst_63 = arith.constant 0.000000e+00 : f32
    %97 = vector.broadcast %cst_63 : f32 to vector<12x12x128xf32>
    %98 = arith.cmpf ogt, %96, %97 : vector<12x12x128xf32>
    %cst_64 = arith.constant 1.000000e-01 : f32
    %99 = vector.broadcast %cst_64 : f32 to vector<12x12x128xf32>
    %100 = arith.mulf %99, %96 : vector<12x12x128xf32>
    %101 = arith.select %98, %96, %100 : vector<12x12x128xi1>, vector<12x12x128xf32>
    %102 = arith.truncf %101 : vector<12x12x128xf32> to vector<12x12x128xbf16>
    %c0_65 = arith.constant 0 : index
    %c0_66 = arith.constant 0 : index
    %c0_67 = arith.constant 0 : index
    %c0_68 = arith.constant 0 : index
    %103 = vector.load %arg7[%c0_65, %c0_66, %c0_67, %c0_68] : memref<1x12x12x128xbf16, #tpu.memory_space<vmem>>, vector<1x12x12x128xbf16>
    %104 = vector.shape_cast %103 : vector<1x12x12x128xbf16> to vector<12x12x128xbf16>
    %105 = vector.shape_cast %102 : vector<12x12x128xbf16> to vector<1x12x12x128xbf16>
    tpu.vector_store %arg7[%c0_65, %c0_66, %c0_67, %c0_68], %105 {strides = array<i32>} : memref<1x12x12x128xbf16, #tpu.memory_space<vmem>>, vector<1x12x12x128xbf16>,
    return
  }
  func.func @transform_0(%arg0: i32, %arg1: i32, %arg2: i32) -> (i32, i32, i32, i32) {
    %c0_i32 = arith.constant 0 : i32
    %c0_i32_0 = arith.constant 0 : i32
    %c0_i32_1 = arith.constant 0 : i32
    %c0_i32_2 = arith.constant 0 : i32
    return %arg0, %c0_i32, %c0_i32_0, %c0_i32_1 : i32, i32, i32, i32
  }
  func.func @transform_1(%arg0: i32, %arg1: i32, %arg2: i32) -> (i32, i32, i32) {
    %c0_i32 = arith.constant 0 : i32
    %c0_i32_0 = arith.constant 0 : i32
    %c0_i32_1 = arith.constant 0 : i32
    return %c0_i32, %c0_i32_0, %arg1 : i32, i32, i32
  }
  func.func @transform_2(%arg0: i32, %arg1: i32, %arg2: i32) -> (i32, i32) {
    %c0_i32 = arith.constant 0 : i32
    %c0_i32_0 = arith.constant 0 : i32
    return %c0_i32, %arg1 : i32, i32
  }
  func.func @transform_3(%arg0: i32, %arg1: i32, %arg2: i32) -> (i32, i32) {
    %c0_i32 = arith.constant 0 : i32
    %c0_i32_0 = arith.constant 0 : i32
    return %c0_i32, %arg1 : i32, i32
  }
  func.func @transform_4(%arg0: i32, %arg1: i32, %arg2: i32) -> (i32, i32, i32, i32) {
    %c0_i32 = arith.constant 0 : i32
    %c0_i32_0 = arith.constant 0 : i32
    return %arg0, %arg2, %c0_i32, %arg1 : i32, i32, i32, i32
  }
}

</mosaic_0001>

<llo_original>
// kernel: tpu_custom_call.1
$region0: #{tpu_custom_call.1}
  #allocation0 [shape = 'u32[]', space=smem, size = 0x4, offset = 0x4, fixed_abs, tag = 'smem constant byte address 0x4 - core index']
  #allocation1 [shape = 'u32[72,128]{1,0:T(1,128)}', space=vmem, size = 0x9000, scoped, tag = 'internal scratch']
  %s0 = inlined_call_operand.hbm [shape: bf16[2,14,16,128], index: 0, kind: input, shape index: {}]
  %s1 = inlined_call_operand.hbm [shape: bf16[9,128,128], index: 1, kind: input, shape index: {}]
  %s2 = inlined_call_operand.vmem [shape: f32[1,128], index: 2, kind: input, shape index: {}]
  %s3 = inlined_call_operand.vmem [shape: f32[1,128], index: 3, kind: input, shape index: {}]
  %s4 = inlined_call_operand.vmem [shape: bf16[2,12,12,128], index: 4, kind: output, shape index: {}]
  %s5 = sld [smem:[#allocation0]]
  $region57: #{tpu_custom_call.1} parent=0
    _
  %s7 = ssub.s32 1, %s5
  %s8 = scalar_select 0, %s7, %s5
  $region1: #{tpu_custom_call.1} parent=0
    #allocation2 [shape = 'u8[114688]{0}', space=vmem, size = 0x1c000, scoped, tag = 'input window, operand 0']
    #allocation3 [shape = 's32[2]{0}', space=sflag, size = 0x8, scoped, tag = 'scoped memory for tpu_custom_call.1']
    #allocation4 [shape = 'u8[294912]{0}', space=vmem, size = 0x48000, scoped, tag = 'input window, operand 1, single buffered']
    #allocation5 [shape = 's32[1]{0}', space=sflag, size = 0x4, scoped, tag = 'scoped memory for tpu_custom_call.1']
    %9 = vsyncpa [#allocation3], 0
    %s10 = scalar_lea.sflag [#allocation3], 1
    %11 = vsyncpa %s10, 0
    %12 = vsyncpa [#allocation5], 0
    loop: start=0, step=1, limit=4
    $region2: #{tpu_custom_call.1} parent=1 // loop_pre_header
      _
    $region3: #{tpu_custom_call.1} parent=1 // loop_header
      %s14 = sphi 0, %s18
      %p15 = scmp.ge.s32.totalorder %s14, 4
      %s21 = sphi 0, %s40
      %s22 = sphi 0, %s36
      %s23 = sphi 0, %s32
      %s24 = sphi 0, %s21
      %s25 = sphi 0, %s22
      %s26 = sphi 0, %s23
      %s27 = sphi 0, %s24
      %s28 = sphi 0, %s25
      %s29 = sphi 0, %s26
      %s43 = sphi 0, %s45
      %s46 = sphi 0, %s43
      %s47 = sphi 0, %s46
      %s63 = sphi 0, %s47
      %s69 = sphi 0, %s71
      %s72 = sphi 0, %s69
      %s73 = sphi 0, %s72
      %s89 = sphi 0, %s73
      %s95 = sphi 0, %s97
      %s98 = sphi 0, %s95
      %s99 = sphi 0, %s98
      %s115 = sphi 0, %s99
      %s121 = sphi 0, %s123
      %s124 = sphi 0, %s121
      %s125 = sphi 0, %s124
      %s141 = sphi 0, %s125
      %s151 = sphi 0, %s153
      %s154 = sphi 0, %s151
      %s155 = sphi 0, %s154
      %s171 = sphi 0, %s155
    $region4: #{tpu_custom_call.1} parent=1 // loop_header_branch
      %17 = sbr.rel (%p15) target = $region8
    $region5: #{tpu_custom_call.1} parent=1 // loop_body
      %s19 = ssub.s32 %s14, 1
      %s20 = ssub.s32 %s14, 2
      %s30 = sadd.s32 1, %s23
      %p31 = scmp.ge.s32.totalorder %s30, 1
      %s32 = scalar_select %p31, 0, %s30
      %s33 = sadd.s32 1, %s22
      %s34 = scalar_select %p31, %s33, %s22
      %p35 = scmp.ge.s32.totalorder %s34, 1
      %s36 = scalar_select %p35, 0, %s34
      %s37 = sadd.s32 1, %s21
      %s38 = scalar_select %p35, %s37, %s21
      %p39 = scmp.ge.s32.totalorder %s38, 2
      %s40 = scalar_select %p39, 0, %s38
      %s41 = ssub.s32 %s21, %s40
      %p42 = scmp.eq.s32.totalorder %s41, 0
      %s44 = sadd.s32 %s43, 1
      %s45 = scalar_select %p42, %s43, %s44
      %p48 = pneg %p42
      %p49 = scmp.eq.s32.totalorder %s14, 1
      %p50 = por %p48, %p49
      %p51 = scmp.ne.s32.totalorder %s43, %s46
      %p52 = scmp.eq.s32.totalorder %s14, 0
      %p53 = por %p51, %p52
      %p54 = scmp.ne.s32.totalorder %s43, %s46
      %p55 = scmp.eq.s32.totalorder %s19, 1
      %p56 = por %p54, %p55
      %p57 = scmp.ne.s32.totalorder %s46, %s47
      %p58 = scmp.eq.s32.totalorder %s19, 0
      %p59 = por %p57, %p58
      %p60 = scmp.ne.s32.totalorder %s46, %s47
      %p61 = scmp.eq.s32.totalorder %s20, 1
      %p62 = por %p60, %p61
      %p64 = scmp.ne.s32.totalorder %s47, %s63
      %p65 = scmp.eq.s32.totalorder %s20, 0
      %p66 = por %p64, %p65
      %s67 = ssub.s32 %s22, %s36
      %p68 = scmp.eq.s32.totalorder %s67, 0
      %s70 = sadd.s32 %s69, 1
      %s71 = scalar_select %p68, %s69, %s70
      %p74 = pneg %p68
      %p75 = scmp.eq.s32.totalorder %s14, 1
      %p76 = por %p74, %p75
      %p77 = scmp.ne.s32.totalorder %s69, %s72
      %p78 = scmp.eq.s32.totalorder %s14, 0
      %p79 = por %p77, %p78
      %p80 = scmp.ne.s32.totalorder %s69, %s72
      %p81 = scmp.eq.s32.totalorder %s19, 1
      %p82 = por %p80, %p81
      %p83 = scmp.ne.s32.totalorder %s72, %s73
      %p84 = scmp.eq.s32.totalorder %s19, 0
      %p85 = por %p83, %p84
      %p86 = scmp.ne.s32.totalorder %s72, %s73
      %p87 = scmp.eq.s32.totalorder %s20, 1
      %p88 = por %p86, %p87
      %p90 = scmp.ne.s32.totalorder %s73, %s89
      %p91 = scmp.eq.s32.totalorder %s20, 0
      %p92 = por %p90, %p91
      %s93 = ssub.s32 %s22, %s36
      %p94 = scmp.eq.s32.totalorder %s93, 0
      %s96 = sadd.s32 %s95, 1
      %s97 = scalar_select %p94, %s95, %s96
      %p100 = pneg %p94
      %p101 = scmp.eq.s32.totalorder %s14, 1
      %p102 = por %p100, %p101
      %p103 = scmp.ne.s32.totalorder %s95, %s98
      %p104 = scmp.eq.s32.totalorder %s14, 0
      %p105 = por %p103, %p104
      %p106 = scmp.ne.s32.totalorder %s95, %s98
      %p107 = scmp.eq.s32.totalorder %s19, 1
      %p108 = por %p106, %p107
      %p109 = scmp.ne.s32.totalorder %s98, %s99
      %p110 = scmp.eq.s32.totalorder %s19, 0
      %p111 = por %p109, %p110
      %p112 = scmp.ne.s32.totalorder %s98, %s99
      %p113 = scmp.eq.s32.totalorder %s20, 1
      %p114 = por %p112, %p113
      %p116 = scmp.ne.s32.totalorder %s99, %s115
      %p117 = scmp.eq.s32.totalorder %s20, 0
      %p118 = por %p116, %p117
      %s119 = ssub.s32 %s22, %s36
      %p120 = scmp.eq.s32.totalorder %s119, 0
      %s122 = sadd.s32 %s121, 1
      %s123 = scalar_select %p120, %s121, %s122
      %p126 = pneg %p120
      %p127 = scmp.eq.s32.totalorder %s14, 1
      %p128 = por %p126, %p127
      %p129 = scmp.ne.s32.totalorder %s121, %s124
      %p130 = scmp.eq.s32.totalorder %s14, 0
      %p131 = por %p129, %p130
      %p132 = scmp.ne.s32.totalorder %s121, %s124
      %p133 = scmp.eq.s32.totalorder %s19, 1
      %p134 = por %p132, %p133
      %p135 = scmp.ne.s32.totalorder %s124, %s125
      %p136 = scmp.eq.s32.totalorder %s19, 0
      %p137 = por %p135, %p136
      %p138 = scmp.ne.s32.totalorder %s124, %s125
      %p139 = scmp.eq.s32.totalorder %s20, 1
      %p140 = por %p138, %p139
      %p142 = scmp.ne.s32.totalorder %s125, %s141
      %p143 = scmp.eq.s32.totalorder %s20, 0
      %p144 = por %p142, %p143
      %s145 = ssub.s32 %s21, %s40
      %s146 = ssub.s32 %s23, %s32
      %s147 = sor.u32 %s145, %s146
      %s148 = ssub.s32 %s22, %s36
      %s149 = sor.u32 %s147, %s148
      %p150 = scmp.eq.s32.totalorder %s149, 0
      %s152 = sadd.s32 %s151, 1
      %s153 = scalar_select %p150, %s151, %s152
      %p156 = pneg %p150
      %p157 = scmp.eq.s32.totalorder %s14, 1
      %p158 = por %p156, %p157
      %p159 = scmp.ne.s32.totalorder %s151, %s154
      %p160 = scmp.eq.s32.totalorder %s14, 0
      %p161 = por %p159, %p160
      %p162 = scmp.ne.s32.totalorder %s151, %s154
      %p163 = scmp.eq.s32.totalorder %s19, 1
      %p164 = por %p162, %p163
      %p165 = scmp.ne.s32.totalorder %s154, %s155
      %p166 = scmp.eq.s32.totalorder %s19, 0
      %p167 = por %p165, %p166
      %p168 = scmp.ne.s32.totalorder %s154, %s155
      %p169 = scmp.eq.s32.totalorder %s20, 1
      %p170 = por %p168, %p169
      %p172 = scmp.ne.s32.totalorder %s155, %s171
      %p173 = scmp.eq.s32.totalorder %s20, 0
      %p174 = por %p172, %p173
      %p175 = scmp.le.s32.totalorder 1, %s14
      %p176 = scmp.lt.s32.totalorder %s14, 3
      %p177 = pnand %p175, %p176
      %p178 = pneg %p177
      // Predicated region
      $region9: #{tpu_custom_call.1} parent=5 // pred_check
        _
      $region10: #{tpu_custom_call.1} parent=5 // pred_check_branch
        %180 = sbr.rel (%p177) target = $region12
      $region11: #{tpu_custom_call.1} parent=5 // pred_region
        %s181 = ssub.s32 %s14, 1
        // Predicated region
        $region13: #{tpu_custom_call.1} parent=11 // pred_check
          %p182 = pneg %p85
        $region14: #{tpu_custom_call.1} parent=11 // pred_check_branch
          %184 = sbr.rel (%p182) target = $region16
        $region15: #{tpu_custom_call.1} parent=11 // pred_region
          %186 = vsyncadd [#allocation5], 0
          %s187 = smul.addr %s25, 4
          %s188 = scalar_lea.hbm %s1, %s187
          %s189 = sshll.u32 %s188, 4
          %s190 = int_to_ptr.hbm [resolvable:$true] %s189
          %s191 = sshll.u32 [#allocation4], 4
          %s192 = int_to_ptr.vmem [resolvable:$true] %s191
          %197 = dma.hbm_to_vmem [thread:$0]  %s190, 9216, %s192, [#allocation5], 64, 64, 4
        $region16: #{tpu_custom_call.1} parent=11 // pred_fallthru
          _
        // Predicated region
        $region17: #{tpu_custom_call.1} parent=11 // pred_check
          %p198 = pneg %p111
        $region18: #{tpu_custom_call.1} parent=11 // pred_check_branch
          %200 = sbr.rel (%p198) target = $region20
        $region19: #{tpu_custom_call.1} parent=11 // pred_region
          %p201 = scmp.lt.s32.totalorder %s25, 0
          %s202 = scalar_select %p201, %s25, 0
          %s203 = scalar_lea.vmem %s2, %s202
        $region20: #{tpu_custom_call.1} parent=11 // pred_fallthru
          _
        // Predicated region
        $region21: #{tpu_custom_call.1} parent=11 // pred_check
          %p204 = pneg %p137
        $region22: #{tpu_custom_call.1} parent=11 // pred_check_branch
          %206 = sbr.rel (%p204) target = $region24
        $region23: #{tpu_custom_call.1} parent=11 // pred_region
          %p207 = scmp.lt.s32.totalorder %s25, 0
          %s208 = scalar_select %p207, %s25, 0
          %s209 = scalar_lea.vmem %s3, %s208
        $region24: #{tpu_custom_call.1} parent=11 // pred_fallthru
          _
      $region12: #{tpu_custom_call.1} parent=5 // pred_fallthru
        _
      %p210 = scmp.lt.s32.totalorder %s14, 2
      // Predicated region
      $region25: #{tpu_custom_call.1} parent=5 // pred_check
        %p211 = pneg %p210
      $region26: #{tpu_custom_call.1} parent=5 // pred_check_branch
        %213 = sbr.rel (%p211) target = $region28
      $region27: #{tpu_custom_call.1} parent=5 // pred_region
        // Predicated region
        $region29: #{tpu_custom_call.1} parent=27 // pred_check
          %p214 = pneg %p53
        $region30: #{tpu_custom_call.1} parent=27 // pred_check_branch
          %216 = sbr.rel (%p214) target = $region32
        $region31: #{tpu_custom_call.1} parent=27 // pred_region
          %s217 = sand.u32 %s43, 1
          %s218 = scalar_lea.sflag [#allocation3], %s217
          %s219 = sand.u32 %s43, 1
          %s220 = smul.addr %s219, 112
          %s221 = scalar_lea.vmem [#allocation2], %s220
          %223 = vsyncadd %s218, 0
          %s224 = smul.addr %s21, 28
          %s225 = smul.addr %s224, 4
          %s226 = scalar_lea.hbm %s0, %s225
          %s227 = sshll.u32 %s226, 4
          %s228 = int_to_ptr.hbm [resolvable:$true] %s227
          %s229 = sshll.u32 %s221, 4
          %s230 = int_to_ptr.vmem [resolvable:$true] %s229
          %235 = dma.hbm_to_vmem [thread:$0]  %s228, 1792, %s230, %s218, 64, 64, 4
        $region32: #{tpu_custom_call.1} parent=27 // pred_fallthru
          _
      $region28: #{tpu_custom_call.1} parent=5 // pred_fallthru
        _
      %p236 = scmp.le.s32.totalorder 1, %s14
      %p237 = scmp.lt.s32.totalorder %s14, 3
      %p238 = pnand %p236, %p237
      %p239 = pneg %p238
      // Predicated region
      $region33: #{tpu_custom_call.1} parent=5 // pred_check
        _
      $region34: #{tpu_custom_call.1} parent=5 // pred_check_branch
        %241 = sbr.rel (%p238) target = $region36
      $region35: #{tpu_custom_call.1} parent=5 // pred_region
        %s242 = ssub.s32 %s14, 1
        %s243 = sand.u32 %s46, 1
        %s244 = scalar_lea.sflag [#allocation3], %s243
        %s245 = sand.u32 %s46, 1
        %s246 = smul.addr %s245, 112
        %s247 = scalar_lea.vmem [#allocation2], %s246
        // Predicated region
        $region37: #{tpu_custom_call.1} parent=35 // pred_check
          %p248 = pneg %p59
        $region38: #{tpu_custom_call.1} parent=35 // pred_check_branch
          %250 = sbr.rel (%p248) target = $region40
        $region39: #{tpu_custom_call.1} parent=35 // pred_region
          %252 = dma.done %s244, 1792
        $region40: #{tpu_custom_call.1} parent=35 // pred_fallthru
          _
        // Predicated region
        $region41: #{tpu_custom_call.1} parent=35 // pred_check
          %p253 = pneg %p85
        $region42: #{tpu_custom_call.1} parent=35 // pred_check_branch
          %255 = sbr.rel (%p253) target = $region44
        $region43: #{tpu_custom_call.1} parent=35 // pred_region
          %257 = dma.done [#allocation5], 9216
        $region44: #{tpu_custom_call.1} parent=35 // pred_fallthru
          _
        %s258 = sand.u32 %s46, 1
        %s259 = scalar_lea.sflag [#allocation3], %s258
        %s260 = sand.u32 %s46, 1
        %s261 = smul.addr %s260, 112
        %s262 = scalar_lea.vmem [#allocation2], %s261
        %p263 = pneg %p59
        %p264 = pneg %p56
        %p265 = pneg %p85
        %p266 = pneg %p82
        %p267 = scmp.lt.s32.totalorder %s25, 0
        %s268 = scalar_select %p267, %s25, 0
        %s269 = scalar_lea.vmem %s2, %s268
        %p270 = pneg %p111
        %p271 = pneg %p108
        %p272 = scmp.lt.s32.totalorder %s25, 0
        %s273 = scalar_select %p272, %s25, 0
        %s274 = scalar_lea.vmem %s3, %s273
        %p275 = pneg %p137
        %p276 = pneg %p134
        %p277 = pneg %p167
        %p278 = pneg %p164
        %s279 = smul.u32 12, %s26
        %p280 = scmp.lt.s32.totalorder %s24, 1
        %s281 = scalar_select %p280, %s24, 1
        %p282 = scmp.lt.s32.totalorder %s279, 11
        %s283 = scalar_select %p282, %s279, 11
        %p284 = scmp.lt.s32.totalorder %s25, 0
        %s285 = scalar_select %p284, %s25, 0
        %s286 = smul.addr %s283, 2
        %s287 = sadd.s32 %s285, %s286
        %s288 = smul.addr %s281, 24
        %s289 = sadd.s32 %s287, %s288
        %s290 = smul.addr %s289, 4
        %s291 = scalar_lea.vmem %s4, %s290
        %p292 = scmp.lt.s32.totalorder %s25, 0
        %s293 = scalar_select %p292, %s25, 0
        %s294 = scalar_lea.vmem %s2, %s293
        %p295 = scmp.lt.s32.totalorder %s25, 0
        %s296 = scalar_select %p295, %s25, 0
        %s297 = scalar_lea.vmem %s3, %s296
        %s298 = smul.u32 12, %s26
        %p299 = scmp.lt.s32.totalorder %s24, 1
        %s300 = scalar_select %p299, %s24, 1
        %p301 = scmp.lt.s32.totalorder %s298, 11
        %s302 = scalar_select %p301, %s298, 11
        %p303 = scmp.lt.s32.totalorder %s25, 0
        %s304 = scalar_select %p303, %s25, 0
        %s305 = smul.addr %s302, 2
        %s306 = sadd.s32 %s304, %s305
        %s307 = smul.addr %s300, 24
        %s308 = sadd.s32 %s306, %s307
        %s309 = smul.addr %s308, 4
        %s310 = scalar_lea.vmem %s4, %s309
        %s311 = smul.u32 12, %s26
        %s312 = smul.u32 %s26, 12
        %s313 = smul.u32 %s312, 2
        %s314 = smul.addr %s313, 4
        %s315 = scalar_lea.vmem %s247, %s314 [#allocation2]
        %v316 = vld [vmem:[%s315] sm:$0xf]
        %v317 = vld [vmem:[%s315 + $0x4] sm:$0xf]
        %v318 = vld [vmem:[%s315 + $0x8] sm:$0xf]
        %v319 = vld [vmem:[%s315 + $0xc] sm:$0xf]
        %v320 = vld [vmem:[%s315 + $0x10] sm:$0xf]
        %v321 = vld [vmem:[%s315 + $0x14] sm:$0xf]
        %v322 = vld [vmem:[%s315 + $0x18] sm:$0xf]
        %v323 = vld [vmem:[%s315 + $0x1c] sm:$0xf]
        %v324 = vld [vmem:[%s315 + $0x20] sm:$0xf]
        %v325 = vld [vmem:[%s315 + $0x24] sm:$0xf]
        %v326 = vld [vmem:[%s315 + $0x28] sm:$0xf]
        %v327 = vld [vmem:[%s315 + $0x2c] sm:$0xf]
        %v328 = vld [vmem:[%s315 + $0x30] sm:$0xf]
        %v329 = vld [vmem:[%s315 + $0x34] sm:$0xf]
        %v330 = vld [vmem:[%s315 + $0x38] sm:$0xf]
        %v331 = vld [vmem:[%s315 + $0x3c] sm:$0xf]
        %v332 = vld [vmem:[%s315 + $0x40] sm:$0xf]
        %v333 = vld [vmem:[%s315 + $0x44] sm:$0xf]
        %v334 = vld [vmem:[%s315 + $0x48] sm:$0xf]
        %v335 = vld [vmem:[%s315 + $0x4c] sm:$0xf]
        %v336 = vld [vmem:[%s315 + $0x50] sm:$0xf]
        %v337 = vld [vmem:[%s315 + $0x54] sm:$0xf]
        %v338 = vld [vmem:[%s315 + $0x58] sm:$0xf]
        %v339 = vld [vmem:[%s315 + $0x5c] sm:$0xf]
        %v340 = vld [vmem:[#allocation4] sm:$0xf]
        %v341 = vld [vmem:[#allocation4 + $0x4] sm:$0xf]
        %v342 = vld [vmem:[#allocation4 + $0x8] sm:$0xf]
        %v343 = vld [vmem:[#allocation4 + $0xc] sm:$0xf]
        %v344 = vld [vmem:[#allocation4 + $0x10] sm:$0xf]
        %v345 = vld [vmem:[#allocation4 + $0x14] sm:$0xf]
        %v346 = vld [vmem:[#allocation4 + $0x18] sm:$0xf]
        %v347 = vld [vmem:[#allocation4 + $0x1c] sm:$0xf]
        %v348 = vld [vmem:[#allocation4 + $0x20] sm:$0xf]
        %v349 = vld [vmem:[#allocation4 + $0x24] sm:$0xf]
        %v350 = vld [vmem:[#allocation4 + $0x28] sm:$0xf]
        %v351 = vld [vmem:[#allocation4 + $0x2c] sm:$0xf]
        %v352 = vld [vmem:[#allocation4 + $0x30] sm:$0xf]
        %v353 = vld [vmem:[#allocation4 + $0x34] sm:$0xf]
        %v354 = vld [vmem:[#allocation4 + $0x38] sm:$0xf]
        %v355 = vld [vmem:[#allocation4 + $0x3c] sm:$0xf]
        %s356 = sadd.s32 %s312, 1
        %s357 = smul.u32 %s356, 2
        %s358 = smul.addr %s357, 4
        %s359 = scalar_lea.vmem %s247, %s358 [#allocation2]
        %v360 = vld [vmem:[%s359] sm:$0xf]
        %v361 = vld [vmem:[%s359 + $0x4] sm:$0xf]
        %v362 = vld [vmem:[%s359 + $0x8] sm:$0xf]
        %v363 = vld [vmem:[%s359 + $0xc] sm:$0xf]
        %v364 = vld [vmem:[%s359 + $0x10] sm:$0xf]
        %v365 = vld [vmem:[%s359 + $0x14] sm:$0xf]
        %v366 = vld [vmem:[%s359 + $0x18] sm:$0xf]
        %v367 = vld [vmem:[%s359 + $0x1c] sm:$0xf]
        %v368 = vld [vmem:[%s359 + $0x20] sm:$0xf]
        %v369 = vld [vmem:[%s359 + $0x24] sm:$0xf]
        %v370 = vld [vmem:[%s359 + $0x28] sm:$0xf]
        %v371 = vld [vmem:[%s359 + $0x2c] sm:$0xf]
        %v372 = vld [vmem:[%s359 + $0x30] sm:$0xf]
        %v373 = vld [vmem:[%s359 + $0x34] sm:$0xf]
        %v374 = vld [vmem:[%s359 + $0x38] sm:$0xf]
        %v375 = vld [vmem:[%s359 + $0x3c] sm:$0xf]
        %v376 = vld [vmem:[%s359 + $0x40] sm:$0xf]
        %v377 = vld [vmem:[%s359 + $0x44] sm:$0xf]
        %v378 = vld [vmem:[%s359 + $0x48] sm:$0xf]
        %v379 = vld [vmem:[%s359 + $0x4c] sm:$0xf]
        %v380 = vld [vmem:[%s359 + $0x50] sm:$0xf]
        %v381 = vld [vmem:[%s359 + $0x54] sm:$0xf]
        %v382 = vld [vmem:[%s359 + $0x58] sm:$0xf]
        %v383 = vld [vmem:[%s359 + $0x5c] sm:$0xf]
        %s384 = scalar_lea.vmem [#allocation4], 192
        %v385 = vld [vmem:[%s384] sm:$0xf]
        %v386 = vld [vmem:[%s384 + $0x4] sm:$0xf]
        %v387 = vld [vmem:[%s384 + $0x8] sm:$0xf]
        %v388 = vld [vmem:[%s384 + $0xc] sm:$0xf]
        %v389 = vld [vmem:[%s384 + $0x10] sm:$0xf]
        %v390 = vld [vmem:[%s384 + $0x14] sm:$0xf]
        %v391 = vld [vmem:[%s384 + $0x18] sm:$0xf]
        %v392 = vld [vmem:[%s384 + $0x1c] sm:$0xf]
        %v393 = vld [vmem:[%s384 + $0x20] sm:$0xf]
        %v394 = vld [vmem:[%s384 + $0x24] sm:$0xf]
        %v395 = vld [vmem:[%s384 + $0x28] sm:$0xf]
        %v396 = vld [vmem:[%s384 + $0x2c] sm:$0xf]
        %v397 = vld [vmem:[%s384 + $0x30] sm:$0xf]
        %v398 = vld [vmem:[%s384 + $0x34] sm:$0xf]
        %v399 = vld [vmem:[%s384 + $0x38] sm:$0xf]
        %v400 = vld [vmem:[%s384 + $0x3c] sm:$0xf]
        %v425 = vunpack.c.l.b16 %v360
        %v426 = vunpack.c.l.b16 %v361
        %v427 = vunpack.c.l.b16 %v362
        %v428 = vunpack.c.l.b16 %v363
        %v429 = vunpack.c.l.b16 %v364
        %v430 = vunpack.c.l.b16 %v365
        %v431 = vunpack.c.l.b16 %v366
        %v432 = vunpack.c.l.b16 %v367
        %v433 = vunpack.c.l.b16 %v368
        %v434 = vunpack.c.l.b16 %v369
        %v435 = vunpack.c.l.b16 %v370
        %v436 = vunpack.c.l.b16 %v371
        %v437 = vunpack.c.l.b16 %v372
        %v438 = vunpack.c.l.b16 %v373
        %v439 = vunpack.c.l.b16 %v374
        %v440 = vunpack.c.l.b16 %v375
        %v441 = vunpack.c.l.b16 %v376
        %v442 = vunpack.c.l.b16 %v377
        %v443 = vunpack.c.l.b16 %v378
        %v444 = vunpack.c.l.b16 %v379
        %v445 = vunpack.c.l.b16 %v380
        %v446 = vunpack.c.l.b16 %v381
        %v447 = vunpack.c.l.b16 %v382
        %v448 = vunpack.c.l.b16 %v383
        %v449 = vpack.c.b16 %v426, %v425
        %v450 = vpack.c.b16 %v428, %v427
        %v451 = vpack.c.b16 %v430, %v429
        %v452 = vpack.c.b16 %v432, %v431
        %v453 = vpack.c.b16 %v434, %v433
        %v454 = vpack.c.b16 %v436, %v435
        %v455 = vpack.c.b16 %v438, %v437
        %v456 = vpack.c.b16 %v440, %v439
        %v457 = vpack.c.b16 %v442, %v441
        %v458 = vpack.c.b16 %v444, %v443
        %v459 = vpack.c.b16 %v446, %v445
        %v460 = vpack.c.b16 %v448, %v447
        %v489 = vunpack.c.l.b16 %v385
        %v490 = vunpack.c.l.b16 %v386
        %v491 = vunpack.c.l.b16 %v387
        %v492 = vunpack.c.l.b16 %v388
        %v493 = vunpack.c.l.b16 %v389
        %v494 = vunpack.c.l.b16 %v390
        %v495 = vunpack.c.l.b16 %v391
        %v496 = vunpack.c.l.b16 %v392
        %v497 = vunpack.c.l.b16 %v393
        %v498 = vunpack.c.l.b16 %v394
        %v499 = vunpack.c.l.b16 %v395
        %v500 = vunpack.c.l.b16 %v396
        %v501 = vunpack.c.l.b16 %v397
        %v502 = vunpack.c.l.b16 %v398
        %v503 = vunpack.c.l.b16 %v399
        %v504 = vunpack.c.l.b16 %v400
        %v505 = vpack.c.b16 %v490, %v489
        %v506 = vpack.c.b16 %v492, %v491
        %v507 = vpack.c.b16 %v494, %v493
        %v508 = vpack.c.b16 %v496, %v495
        %v509 = vpack.c.b16 %v498, %v497
        %v510 = vpack.c.b16 %v500, %v499
        %v511 = vpack.c.b16 %v502, %v501
        %v512 = vpack.c.b16 %v504, %v503
        %521 = vmatpush.bf16.msra.mxu0 %v512
        %522 = vmatpush.bf16.msra.mxu0 %v511
        %523 = vmatpush.bf16.msra.mxu0 %v510
        %524 = vmatpush.bf16.msra.mxu0 %v509
        %525 = vmatpush.bf16.msra.mxu0 %v508
        %526 = vmatpush.bf16.msra.mxu0 %v507
        %527 = vmatpush.bf16.msra.mxu0 %v506
        %528 = vmatpush.bf16.msra.mxu0 %v505
        %529 = vmatmul.bf16.gmra.mxu0 %v449
        %v530 = vpop.f32.mrf.mxu0
        %v531 = vadd.f32 0.0, %v530
        %v532 = vpop.f32.mrf.mxu0
        %v533 = vadd.f32 0.0, %v532
        %534 = vmatmul.bf16.gmra.mxu0 %v450
        %v535 = vpop.f32.mrf.mxu0
        %v536 = vadd.f32 0.0, %v535
        %v537 = vpop.f32.mrf.mxu0
        %v538 = vadd.f32 0.0, %v537
        %539 = vmatmul.bf16.gmra.mxu0 %v451
        %v540 = vpop.f32.mrf.mxu0
        %v541 = vadd.f32 0.0, %v540
        %v542 = vpop.f32.mrf.mxu0
        %v543 = vadd.f32 0.0, %v542
        %544 = vmatmul.bf16.gmra.mxu0 %v452
        %v545 = vpop.f32.mrf.mxu0
        %v546 = vadd.f32 0.0, %v545
        %v547 = vpop.f32.mrf.mxu0
        %v548 = vadd.f32 0.0, %v547
        %549 = vmatmul.bf16.gmra.mxu0 %v453
        %v550 = vpop.f32.mrf.mxu0
        %v551 = vadd.f32 0.0, %v550
        %v552 = vpop.f32.mrf.mxu0
        %v553 = vadd.f32 0.0, %v552
        %554 = vmatmul.bf16.gmra.mxu0 %v454
        %v555 = vpop.f32.mrf.mxu0
        %v556 = vadd.f32 0.0, %v555
        %v557 = vpop.f32.mrf.mxu0
        %v558 = vadd.f32 0.0, %v557
        %559 = vmatmul.bf16.gmra.mxu0 %v455
        %v560 = vpop.f32.mrf.mxu0
        %v561 = vadd.f32 0.0, %v560
        %v562 = vpop.f32.mrf.mxu0
        %v563 = vadd.f32 0.0, %v562
        %564 = vmatmul.bf16.gmra.mxu0 %v456
        %v565 = vpop.f32.mrf.mxu0
        %v566 = vadd.f32 0.0, %v565
        %v567 = vpop.f32.mrf.mxu0
        %v568 = vadd.f32 0.0, %v567
        %569 = vmatmul.bf16.gmra.mxu0 %v457
        %v570 = vpop.f32.mrf.mxu0
        %v571 = vadd.f32 0.0, %v570
        %v572 = vpop.f32.mrf.mxu0
        %v573 = vadd.f32 0.0, %v572
        %574 = vmatmul.bf16.gmra.mxu0 %v458
        %v575 = vpop.f32.mrf.mxu0
        %v576 = vadd.f32 0.0, %v575
        %v577 = vpop.f32.mrf.mxu0
        %v578 = vadd.f32 0.0, %v577
        %579 = vmatmul.bf16.gmra.mxu0 %v459
        %v580 = vpop.f32.mrf.mxu0
        %v581 = vadd.f32 0.0, %v580
        %v582 = vpop.f32.mrf.mxu0
        %v583 = vadd.f32 0.0, %v582
        %584 = vmatmul.bf16.gmra.mxu0 %v460
        %v585 = vpop.f32.mrf.mxu0
        %v586 = vadd.f32 0.0, %v585
        %v587 = vpop.f32.mrf.mxu0
        %v588 = vadd.f32 0.0, %v587
        %589 = vdwg.mxu0
        %v614 = vunpack.c.l.b16 %v316
        %v615 = vunpack.c.l.b16 %v317
        %v616 = vunpack.c.l.b16 %v318
        %v617 = vunpack.c.l.b16 %v319
        %v618 = vunpack.c.l.b16 %v320
        %v619 = vunpack.c.l.b16 %v321
        %v620 = vunpack.c.l.b16 %v322
        %v621 = vunpack.c.l.b16 %v323
        %v622 = vunpack.c.l.b16 %v324
        %v623 = vunpack.c.l.b16 %v325
        %v624 = vunpack.c.l.b16 %v326
        %v625 = vunpack.c.l.b16 %v327
        %v626 = vunpack.c.l.b16 %v328
        %v627 = vunpack.c.l.b16 %v329
        %v628 = vunpack.c.l.b16 %v330
        %v629 = vunpack.c.l.b16 %v331
        %v630 = vunpack.c.l.b16 %v332
        %v631 = vunpack.c.l.b16 %v333
        %v632 = vunpack.c.l.b16 %v334
        %v633 = vunpack.c.l.b16 %v335
        %v634 = vunpack.c.l.b16 %v336
        %v635 = vunpack.c.l.b16 %v337
        %v636 = vunpack.c.l.b16 %v338
        %v637 = vunpack.c.l.b16 %v339
        %v638 = vpack.c.b16 %v615, %v614
        %v639 = vpack.c.b16 %v617, %v616
        %v640 = vpack.c.b16 %v619, %v618
        %v641 = vpack.c.b16 %v621, %v620
        %v642 = vpack.c.b16 %v623, %v622
        %v643 = vpack.c.b16 %v625, %v624
        %v644 = vpack.c.b16 %v627, %v626
        %v645 = vpack.c.b16 %v629, %v628
        %v646 = vpack.c.b16 %v631, %v630
        %v647 = vpack.c.b16 %v633, %v632
        %v648 = vpack.c.b16 %v635, %v634
        %v649 = vpack.c.b16 %v637, %v636
        %v678 = vunpack.c.l.b16 %v340
        %v679 = vunpack.c.l.b16 %v341
        %v680 = vunpack.c.l.b16 %v342
        %v681 = vunpack.c.l.b16 %v343
        %v682 = vunpack.c.l.b16 %v344
        %v683 = vunpack.c.l.b16 %v345
        %v684 = vunpack.c.l.b16 %v346
        %v685 = vunpack.c.l.b16 %v347
        %v686 = vunpack.c.l.b16 %v348
        %v687 = vunpack.c.l.b16 %v349
        %v688 = vunpack.c.l.b16 %v350
        %v689 = vunpack.c.l.b16 %v351
        %v690 = vunpack.c.l.b16 %v352
        %v691 = vunpack.c.l.b16 %v353
        %v692 = vunpack.c.l.b16 %v354
        %v693 = vunpack.c.l.b16 %v355
        %v694 = vpack.c.b16 %v679, %v678
        %v695 = vpack.c.b16 %v681, %v680
        %v696 = vpack.c.b16 %v683, %v682
        %v697 = vpack.c.b16 %v685, %v684
        %v698 = vpack.c.b16 %v687, %v686
        %v699 = vpack.c.b16 %v689, %v688
        %v700 = vpack.c.b16 %v691, %v690
        %v701 = vpack.c.b16 %v693, %v692
        %710 = vmatpush.bf16.msra.mxu0 %v701
        %711 = vmatpush.bf16.msra.mxu0 %v700
        %712 = vmatpush.bf16.msra.mxu0 %v699
        %713 = vmatpush.bf16.msra.mxu0 %v698
        %714 = vmatpush.bf16.msra.mxu0 %v697
        %715 = vmatpush.bf16.msra.mxu0 %v696
        %716 = vmatpush.bf16.msra.mxu0 %v695
        %717 = vmatpush.bf16.msra.mxu0 %v694
        %718 = vmatmul.bf16.gmra.mxu0 %v638
        %v719 = vpop.f32.mrf.mxu0
        %v720 = vadd.f32 %v531, %v719
        %v721 = vpop.f32.mrf.mxu0
        %v722 = vadd.f32 %v533, %v721
        %723 = vmatmul.bf16.gmra.mxu0 %v639
        %v724 = vpop.f32.mrf.mxu0
        %v725 = vadd.f32 %v536, %v724
        %v726 = vpop.f32.mrf.mxu0
        %v727 = vadd.f32 %v538, %v726
        %728 = vmatmul.bf16.gmra.mxu0 %v640
        %v729 = vpop.f32.mrf.mxu0
        %v730 = vadd.f32 %v541, %v729
        %v731 = vpop.f32.mrf.mxu0
        %v732 = vadd.f32 %v543, %v731
        %733 = vmatmul.bf16.gmra.mxu0 %v641
        %v734 = vpop.f32.mrf.mxu0
        %v735 = vadd.f32 %v546, %v734
        %v736 = vpop.f32.mrf.mxu0
        %v737 = vadd.f32 %v548, %v736
        %738 = vmatmul.bf16.gmra.mxu0 %v642
        %v739 = vpop.f32.mrf.mxu0
        %v740 = vadd.f32 %v551, %v739
        %v741 = vpop.f32.mrf.mxu0
        %v742 = vadd.f32 %v553, %v741
        %743 = vmatmul.bf16.gmra.mxu0 %v643
        %v744 = vpop.f32.mrf.mxu0
        %v745 = vadd.f32 %v556, %v744
        %v746 = vpop.f32.mrf.mxu0
        %v747 = vadd.f32 %v558, %v746
        %748 = vmatmul.bf16.gmra.mxu0 %v644
        %v749 = vpop.f32.mrf.mxu0
        %v750 = vadd.f32 %v561, %v749
        %v751 = vpop.f32.mrf.mxu0
        %v752 = vadd.f32 %v563, %v751
        %753 = vmatmul.bf16.gmra.mxu0 %v645
        %v754 = vpop.f32.mrf.mxu0
        %v755 = vadd.f32 %v566, %v754
        %v756 = vpop.f32.mrf.mxu0
        %v757 = vadd.f32 %v568, %v756
        %758 = vmatmul.bf16.gmra.mxu0 %v646
        %v759 = vpop.f32.mrf.mxu0
        %v760 = vadd.f32 %v571, %v759
        %v761 = vpop.f32.mrf.mxu0
        %v762 = vadd.f32 %v573, %v761
        %763 = vmatmul.bf16.gmra.mxu0 %v647
        %v764 = vpop.f32.mrf.mxu0
        %v765 = vadd.f32 %v576, %v764
        %v766 = vpop.f32.mrf.mxu0
        %v767 = vadd.f32 %v578, %v766
        %768 = vmatmul.bf16.gmra.mxu0 %v648
        %v769 = vpop.f32.mrf.mxu0
        %v770 = vadd.f32 %v581, %v769
        %v771 = vpop.f32.mrf.mxu0
        %v772 = vadd.f32 %v583, %v771
        %773 = vmatmul.bf16.gmra.mxu0 %v649
        %v774 = vpop.f32.mrf.mxu0
        %v775 = vadd.f32 %v586, %v774
        %v776 = vpop.f32.mrf.mxu0
        %v777 = vadd.f32 %v588, %v776
        %778 = vdwg.mxu0
        %s779 = sadd.s32 %s312, 2
        %s780 = smul.u32 %s779, 2
        %s781 = smul.addr %s780, 4
        %s782 = scalar_lea.vmem %s247, %s781 [#allocation2]
        %v783 = vld [vmem:[%s782] sm:$0xf]
        %v784 = vld [vmem:[%s782 + $0x4] sm:$0xf]
        %v785 = vld [vmem:[%s782 + $0x8] sm:$0xf]
        %v786 = vld [vmem:[%s782 + $0xc] sm:$0xf]
        %v787 = vld [vmem:[%s782 + $0x10] sm:$0xf]
        %v788 = vld [vmem:[%s782 + $0x14] sm:$0xf]
        %v789 = vld [vmem:[%s782 + $0x18] sm:$0xf]
        %v790 = vld [vmem:[%s782 + $0x1c] sm:$0xf]
        %v791 = vld [vmem:[%s782 + $0x20] sm:$0xf]
        %v792 = vld [vmem:[%s782 + $0x24] sm:$0xf]
        %v793 = vld [vmem:[%s782 + $0x28] sm:$0xf]
        %v794 = vld [vmem:[%s782 + $0x2c] sm:$0xf]
        %v795 = vld [vmem:[%s782 + $0x30] sm:$0xf]
        %v796 = vld [vmem:[%s782 + $0x34] sm:$0xf]
        %v797 = vld [vmem:[%s782 + $0x38] sm:$0xf]
        %v798 = vld [vmem:[%s782 + $0x3c] sm:$0xf]
        %v799 = vld [vmem:[%s782 + $0x40] sm:$0xf]
        %v800 = vld [vmem:[%s782 + $0x44] sm:$0xf]
        %v801 = vld [vmem:[%s782 + $0x48] sm:$0xf]
        %v802 = vld [vmem:[%s782 + $0x4c] sm:$0xf]
        %v803 = vld [vmem:[%s782 + $0x50] sm:$0xf]
        %v804 = vld [vmem:[%s782 + $0x54] sm:$0xf]
        %v805 = vld [vmem:[%s782 + $0x58] sm:$0xf]
        %v806 = vld [vmem:[%s782 + $0x5c] sm:$0xf]
        %s807 = scalar_lea.vmem [#allocation4], 384
        %v808 = vld [vmem:[%s807] sm:$0xf]
        %v809 = vld [vmem:[%s807 + $0x4] sm:$0xf]
        %v810 = vld [vmem:[%s807 + $0x8] sm:$0xf]
        %v811 = vld [vmem:[%s807 + $0xc] sm:$0xf]
        %v812 = vld [vmem:[%s807 + $0x10] sm:$0xf]
        %v813 = vld [vmem:[%s807 + $0x14] sm:$0xf]
        %v814 = vld [vmem:[%s807 + $0x18] sm:$0xf]
        %v815 = vld [vmem:[%s807 + $0x1c] sm:$0xf]
        %v816 = vld [vmem:[%s807 + $0x20] sm:$0xf]
        %v817 = vld [vmem:[%s807 + $0x24] sm:$0xf]
        %v818 = vld [vmem:[%s807 + $0x28] sm:$0xf]
        %v819 = vld [vmem:[%s807 + $0x2c] sm:$0xf]
        %v820 = vld [vmem:[%s807 + $0x30] sm:$0xf]
        %v821 = vld [vmem:[%s807 + $0x34] sm:$0xf]
        %v822 = vld [vmem:[%s807 + $0x38] sm:$0xf]
        %v823 = vld [vmem:[%s807 + $0x3c] sm:$0xf]
        %v848 = vunpack.c.l.b16 %v783
        %v849 = vunpack.c.l.b16 %v784
        %v850 = vunpack.c.l.b16 %v785
        %v851 = vunpack.c.l.b16 %v786
        %v852 = vunpack.c.l.b16 %v787
        %v853 = vunpack.c.l.b16 %v788
        %v854 = vunpack.c.l.b16 %v789
        %v855 = vunpack.c.l.b16 %v790
        %v856 = vunpack.c.l.b16 %v791
        %v857 = vunpack.c.l.b16 %v792
        %v858 = vunpack.c.l.b16 %v793
        %v859 = vunpack.c.l.b16 %v794
        %v860 = vunpack.c.l.b16 %v795
        %v861 = vunpack.c.l.b16 %v796
        %v862 = vunpack.c.l.b16 %v797
        %v863 = vunpack.c.l.b16 %v798
        %v864 = vunpack.c.l.b16 %v799
        %v865 = vunpack.c.l.b16 %v800
        %v866 = vunpack.c.l.b16 %v801
        %v867 = vunpack.c.l.b16 %v802
        %v868 = vunpack.c.l.b16 %v803
        %v869 = vunpack.c.l.b16 %v804
        %v870 = vunpack.c.l.b16 %v805
        %v871 = vunpack.c.l.b16 %v806
        %v872 = vpack.c.b16 %v849, %v848
        %v873 = vpack.c.b16 %v851, %v850
        %v874 = vpack.c.b16 %v853, %v852
        %v875 = vpack.c.b16 %v855, %v854
        %v876 = vpack.c.b16 %v857, %v856
        %v877 = vpack.c.b16 %v859, %v858
        %v878 = vpack.c.b16 %v861, %v860
        %v879 = vpack.c.b16 %v863, %v862
        %v880 = vpack.c.b16 %v865, %v864
        %v881 = vpack.c.b16 %v867, %v866
        %v882 = vpack.c.b16 %v869, %v868
        %v883 = vpack.c.b16 %v871, %v870
        %v912 = vunpack.c.l.b16 %v808
        %v913 = vunpack.c.l.b16 %v809
        %v914 = vunpack.c.l.b16 %v810
        %v915 = vunpack.c.l.b16 %v811
        %v916 = vunpack.c.l.b16 %v812
        %v917 = vunpack.c.l.b16 %v813
        %v918 = vunpack.c.l.b16 %v814
        %v919 = vunpack.c.l.b16 %v815
        %v920 = vunpack.c.l.b16 %v816
        %v921 = vunpack.c.l.b16 %v817
        %v922 = vunpack.c.l.b16 %v818
        %v923 = vunpack.c.l.b16 %v819
        %v924 = vunpack.c.l.b16 %v820
        %v925 = vunpack.c.l.b16 %v821
        %v926 = vunpack.c.l.b16 %v822
        %v927 = vunpack.c.l.b16 %v823
        %v928 = vpack.c.b16 %v913, %v912
        %v929 = vpack.c.b16 %v915, %v914
        %v930 = vpack.c.b16 %v917, %v916
        %v931 = vpack.c.b16 %v919, %v918
        %v932 = vpack.c.b16 %v921, %v920
        %v933 = vpack.c.b16 %v923, %v922
        %v934 = vpack.c.b16 %v925, %v924
        %v935 = vpack.c.b16 %v927, %v926
        %944 = vmatpush.bf16.msra.mxu0 %v935
        %945 = vmatpush.bf16.msra.mxu0 %v934
        %946 = vmatpush.bf16.msra.mxu0 %v933
        %947 = vmatpush.bf16.msra.mxu0 %v932
        %948 = vmatpush.bf16.msra.mxu0 %v931
        %949 = vmatpush.bf16.msra.mxu0 %v930
        %950 = vmatpush.bf16.msra.mxu0 %v929
        %951 = vmatpush.bf16.msra.mxu0 %v928
        %952 = vmatmul.bf16.gmra.mxu0 %v872
        %v953 = vpop.f32.mrf.mxu0
        %v954 = vadd.f32 0.0, %v953
        %v955 = vpop.f32.mrf.mxu0
        %v956 = vadd.f32 0.0, %v955
        %957 = vmatmul.bf16.gmra.mxu0 %v873
        %v958 = vpop.f32.mrf.mxu0
        %v959 = vadd.f32 0.0, %v958
        %v960 = vpop.f32.mrf.mxu0
        %v961 = vadd.f32 0.0, %v960
        %962 = vmatmul.bf16.gmra.mxu0 %v874
        %v963 = vpop.f32.mrf.mxu0
        %v964 = vadd.f32 0.0, %v963
        %v965 = vpop.f32.mrf.mxu0
        %v966 = vadd.f32 0.0, %v965
        %967 = vmatmul.bf16.gmra.mxu0 %v875
        %v968 = vpop.f32.mrf.mxu0
        %v969 = vadd.f32 0.0, %v968
        %v970 = vpop.f32.mrf.mxu0
        %v971 = vadd.f32 0.0, %v970
        %972 = vmatmul.bf16.gmra.mxu0 %v876
        %v973 = vpop.f32.mrf.mxu0
        %v974 = vadd.f32 0.0, %v973
        %v975 = vpop.f32.mrf.mxu0
        %v976 = vadd.f32 0.0, %v975
        %977 = vmatmul.bf16.gmra.mxu0 %v877
        %v978 = vpop.f32.mrf.mxu0
        %v979 = vadd.f32 0.0, %v978
        %v980 = vpop.f32.mrf.mxu0
        %v981 = vadd.f32 0.0, %v980
        %982 = vmatmul.bf16.gmra.mxu0 %v878
        %v983 = vpop.f32.mrf.mxu0
        %v984 = vadd.f32 0.0, %v983
        %v985 = vpop.f32.mrf.mxu0
        %v986 = vadd.f32 0.0, %v985
        %987 = vmatmul.bf16.gmra.mxu0 %v879
        %v988 = vpop.f32.mrf.mxu0
        %v989 = vadd.f32 0.0, %v988
        %v990 = vpop.f32.mrf.mxu0
        %v991 = vadd.f32 0.0, %v990
        %992 = vmatmul.bf16.gmra.mxu0 %v880
        %v993 = vpop.f32.mrf.mxu0
        %v994 = vadd.f32 0.0, %v993
        %v995 = vpop.f32.mrf.mxu0
        %v996 = vadd.f32 0.0, %v995
        %997 = vmatmul.bf16.gmra.mxu0 %v881
        %v998 = vpop.f32.mrf.mxu0
        %v999 = vadd.f32 0.0, %v998
        %v1000 = vpop.f32.mrf.mxu0
        %v1001 = vadd.f32 0.0, %v1000
        %1002 = vmatmul.bf16.gmra.mxu0 %v882
        %v1003 = vpop.f32.mrf.mxu0
        %v1004 = vadd.f32 0.0, %v1003
        %v1005 = vpop.f32.mrf.mxu0
        %v1006 = vadd.f32 0.0, %v1005
        %1007 = vmatmul.bf16.gmra.mxu0 %v883
        %v1008 = vpop.f32.mrf.mxu0
        %v1009 = vadd.f32 0.0, %v1008
        %v1010 = vpop.f32.mrf.mxu0
        %v1011 = vadd.f32 0.0, %v1010
        %1012 = vdwg.mxu0
        %v1013 = vadd.f32 %v720, %v954
        %v1014 = vadd.f32 %v722, %v956
        %v1015 = vadd.f32 %v725, %v959
        %v1016 = vadd.f32 %v727, %v961
        %v1017 = vadd.f32 %v730, %v964
        %v1018 = vadd.f32 %v732, %v966
        %v1019 = vadd.f32 %v735, %v969
        %v1020 = vadd.f32 %v737, %v971
        %v1021 = vadd.f32 %v740, %v974
        %v1022 = vadd.f32 %v742, %v976
        %v1023 = vadd.f32 %v745, %v979
        %v1024 = vadd.f32 %v747, %v981
        %v1025 = vadd.f32 %v750, %v984
        %v1026 = vadd.f32 %v752, %v986
        %v1027 = vadd.f32 %v755, %v989
        %v1028 = vadd.f32 %v757, %v991
        %v1029 = vadd.f32 %v760, %v994
        %v1030 = vadd.f32 %v762, %v996
        %v1031 = vadd.f32 %v765, %v999
        %v1032 = vadd.f32 %v767, %v1001
        %v1033 = vadd.f32 %v770, %v1004
        %v1034 = vadd.f32 %v772, %v1006
        %v1035 = vadd.f32 %v775, %v1009
        %v1036 = vadd.f32 %v777, %v1011
        %s1037 = scalar_lea.vmem [#allocation4], 64
        %v1038 = vld [vmem:[%s1037] sm:$0xf]
        %v1039 = vld [vmem:[%s1037 + $0x4] sm:$0xf]
        %v1040 = vld [vmem:[%s1037 + $0x8] sm:$0xf]
        %v1041 = vld [vmem:[%s1037 + $0xc] sm:$0xf]
        %v1042 = vld [vmem:[%s1037 + $0x10] sm:$0xf]
        %v1043 = vld [vmem:[%s1037 + $0x14] sm:$0xf]
        %v1044 = vld [vmem:[%s1037 + $0x18] sm:$0xf]
        %v1045 = vld [vmem:[%s1037 + $0x1c] sm:$0xf]
        %v1046 = vld [vmem:[%s1037 + $0x20] sm:$0xf]
        %v1047 = vld [vmem:[%s1037 + $0x24] sm:$0xf]
        %v1048 = vld [vmem:[%s1037 + $0x28] sm:$0xf]
        %v1049 = vld [vmem:[%s1037 + $0x2c] sm:$0xf]
        %v1050 = vld [vmem:[%s1037 + $0x30] sm:$0xf]
        %v1051 = vld [vmem:[%s1037 + $0x34] sm:$0xf]
        %v1052 = vld [vmem:[%s1037 + $0x38] sm:$0xf]
        %v1053 = vld [vmem:[%s1037 + $0x3c] sm:$0xf]
        %s1054 = scalar_lea.vmem [#allocation4], 256
        %v1055 = vld [vmem:[%s1054] sm:$0xf]
        %v1056 = vld [vmem:[%s1054 + $0x4] sm:$0xf]
        %v1057 = vld [vmem:[%s1054 + $0x8] sm:$0xf]
        %v1058 = vld [vmem:[%s1054 + $0xc] sm:$0xf]
        %v1059 = vld [vmem:[%s1054 + $0x10] sm:$0xf]
        %v1060 = vld [vmem:[%s1054 + $0x14] sm:$0xf]
        %v1061 = vld [vmem:[%s1054 + $0x18] sm:$0xf]
        %v1062 = vld [vmem:[%s1054 + $0x1c] sm:$0xf]
        %v1063 = vld [vmem:[%s1054 + $0x20] sm:$0xf]
        %v1064 = vld [vmem:[%s1054 + $0x24] sm:$0xf]
        %v1065 = vld [vmem:[%s1054 + $0x28] sm:$0xf]
        %v1066 = vld [vmem:[%s1054 + $0x2c] sm:$0xf]
        %v1067 = vld [vmem:[%s1054 + $0x30] sm:$0xf]
        %v1068 = vld [vmem:[%s1054 + $0x34] sm:$0xf]
        %v1069 = vld [vmem:[%s1054 + $0x38] sm:$0xf]
        %v1070 = vld [vmem:[%s1054 + $0x3c] sm:$0xf]
        %v1087 = vunpack.c.l.b16 %v1055
        %v1088 = vunpack.c.l.b16 %v1056
        %v1089 = vunpack.c.l.b16 %v1057
        %v1090 = vunpack.c.l.b16 %v1058
        %v1091 = vunpack.c.l.b16 %v1059
        %v1092 = vunpack.c.l.b16 %v1060
        %v1093 = vunpack.c.l.b16 %v1061
        %v1094 = vunpack.c.l.b16 %v1062
        %v1095 = vunpack.c.l.b16 %v1063
        %v1096 = vunpack.c.l.b16 %v1064
        %v1097 = vunpack.c.l.b16 %v1065
        %v1098 = vunpack.c.l.b16 %v1066
        %v1099 = vunpack.c.l.b16 %v1067
        %v1100 = vunpack.c.l.b16 %v1068
        %v1101 = vunpack.c.l.b16 %v1069
        %v1102 = vunpack.c.l.b16 %v1070
        %v1103 = vpack.c.b16 %v1088, %v1087
        %v1104 = vpack.c.b16 %v1090, %v1089
        %v1105 = vpack.c.b16 %v1092, %v1091
        %v1106 = vpack.c.b16 %v1094, %v1093
        %v1107 = vpack.c.b16 %v1096, %v1095
        %v1108 = vpack.c.b16 %v1098, %v1097
        %v1109 = vpack.c.b16 %v1100, %v1099
        %v1110 = vpack.c.b16 %v1102, %v1101
        %1119 = vmatpush.bf16.msra.mxu0 %v1110
        %1120 = vmatpush.bf16.msra.mxu0 %v1109
        %1121 = vmatpush.bf16.msra.mxu0 %v1108
        %1122 = vmatpush.bf16.msra.mxu0 %v1107
        %1123 = vmatpush.bf16.msra.mxu0 %v1106
        %1124 = vmatpush.bf16.msra.mxu0 %v1105
        %1125 = vmatpush.bf16.msra.mxu0 %v1104
        %1126 = vmatpush.bf16.msra.mxu0 %v1103
        %1127 = vmatmul.bf16.gmra.mxu0 %v449
        %v1128 = vpop.f32.mrf.mxu0
        %v1129 = vadd.f32 0.0, %v1128
        %v1130 = vpop.f32.mrf.mxu0
        %v1131 = vadd.f32 0.0, %v1130
        %1132 = vmatmul.bf16.gmra.mxu0 %v450
        %v1133 = vpop.f32.mrf.mxu0
        %v1134 = vadd.f32 0.0, %v1133
        %v1135 = vpop.f32.mrf.mxu0
        %v1136 = vadd.f32 0.0, %v1135
        %1137 = vmatmul.bf16.gmra.mxu0 %v451
        %v1138 = vpop.f32.mrf.mxu0
        %v1139 = vadd.f32 0.0, %v1138
        %v1140 = vpop.f32.mrf.mxu0
        %v1141 = vadd.f32 0.0, %v1140
        %1142 = vmatmul.bf16.gmra.mxu0 %v452
        %v1143 = vpop.f32.mrf.mxu0
        %v1144 = vadd.f32 0.0, %v1143
        %v1145 = vpop.f32.mrf.mxu0
        %v1146 = vadd.f32 0.0, %v1145
        %1147 = vmatmul.bf16.gmra.mxu0 %v453
        %v1148 = vpop.f32.mrf.mxu0
        %v1149 = vadd.f32 0.0, %v1148
        %v1150 = vpop.f32.mrf.mxu0
        %v1151 = vadd.f32 0.0, %v1150
        %1152 = vmatmul.bf16.gmra.mxu0 %v454
        %v1153 = vpop.f32.mrf.mxu0
        %v1154 = vadd.f32 0.0, %v1153
        %v1155 = vpop.f32.mrf.mxu0
        %v1156 = vadd.f32 0.0, %v1155
        %1157 = vmatmul.bf16.gmra.mxu0 %v455
        %v1158 = vpop.f32.mrf.mxu0
        %v1159 = vadd.f32 0.0, %v1158
        %v1160 = vpop.f32.mrf.mxu0
        %v1161 = vadd.f32 0.0, %v1160
        %1162 = vmatmul.bf16.gmra.mxu0 %v456
        %v1163 = vpop.f32.mrf.mxu0
        %v1164 = vadd.f32 0.0, %v1163
        %v1165 = vpop.f32.mrf.mxu0
        %v1166 = vadd.f32 0.0, %v1165
        %1167 = vmatmul.bf16.gmra.mxu0 %v457
        %v1168 = vpop.f32.mrf.mxu0
        %v1169 = vadd.f32 0.0, %v1168
        %v1170 = vpop.f32.mrf.mxu0
        %v1171 = vadd.f32 0.0, %v1170
        %1172 = vmatmul.bf16.gmra.mxu0 %v458
        %v1173 = vpop.f32.mrf.mxu0
        %v1174 = vadd.f32 0.0, %v1173
        %v1175 = vpop.f32.mrf.mxu0
        %v1176 = vadd.f32 0.0, %v1175
        %1177 = vmatmul.bf16.gmra.mxu0 %v459
        %v1178 = vpop.f32.mrf.mxu0
        %v1179 = vadd.f32 0.0, %v1178
        %v1180 = vpop.f32.mrf.mxu0
        %v1181 = vadd.f32 0.0, %v1180
        %1182 = vmatmul.bf16.gmra.mxu0 %v460
        %v1183 = vpop.f32.mrf.mxu0
        %v1184 = vadd.f32 0.0, %v1183
        %v1185 = vpop.f32.mrf.mxu0
        %v1186 = vadd.f32 0.0, %v1185
        %1187 = vdwg.mxu0
        %v1204 = vunpack.c.l.b16 %v1038
        %v1205 = vunpack.c.l.b16 %v1039
        %v1206 = vunpack.c.l.b16 %v1040
        %v1207 = vunpack.c.l.b16 %v1041
        %v1208 = vunpack.c.l.b16 %v1042
        %v1209 = vunpack.c.l.b16 %v1043
        %v1210 = vunpack.c.l.b16 %v1044
        %v1211 = vunpack.c.l.b16 %v1045
        %v1212 = vunpack.c.l.b16 %v1046
        %v1213 = vunpack.c.l.b16 %v1047
        %v1214 = vunpack.c.l.b16 %v1048
        %v1215 = vunpack.c.l.b16 %v1049
        %v1216 = vunpack.c.l.b16 %v1050
        %v1217 = vunpack.c.l.b16 %v1051
        %v1218 = vunpack.c.l.b16 %v1052
        %v1219 = vunpack.c.l.b16 %v1053
        %v1220 = vpack.c.b16 %v1205, %v1204
        %v1221 = vpack.c.b16 %v1207, %v1206
        %v1222 = vpack.c.b16 %v1209, %v1208
        %v1223 = vpack.c.b16 %v1211, %v1210
        %v1224 = vpack.c.b16 %v1213, %v1212
        %v1225 = vpack.c.b16 %v1215, %v1214
        %v1226 = vpack.c.b16 %v1217, %v1216
        %v1227 = vpack.c.b16 %v1219, %v1218
        %1236 = vmatpush.bf16.msra.mxu0 %v1227
        %1237 = vmatpush.bf16.msra.mxu0 %v1226
        %1238 = vmatpush.bf16.msra.mxu0 %v1225
        %1239 = vmatpush.bf16.msra.mxu0 %v1224
        %1240 = vmatpush.bf16.msra.mxu0 %v1223
        %1241 = vmatpush.bf16.msra.mxu0 %v1222
        %1242 = vmatpush.bf16.msra.mxu0 %v1221
        %1243 = vmatpush.bf16.msra.mxu0 %v1220
        %1244 = vmatmul.bf16.gmra.mxu0 %v638
        %v1245 = vpop.f32.mrf.mxu0
        %v1246 = vadd.f32 %v1129, %v1245
        %v1247 = vpop.f32.mrf.mxu0
        %v1248 = vadd.f32 %v1131, %v1247
        %1249 = vmatmul.bf16.gmra.mxu0 %v639
        %v1250 = vpop.f32.mrf.mxu0
        %v1251 = vadd.f32 %v1134, %v1250
        %v1252 = vpop.f32.mrf.mxu0
        %v1253 = vadd.f32 %v1136, %v1252
        %1254 = vmatmul.bf16.gmra.mxu0 %v640
        %v1255 = vpop.f32.mrf.mxu0
        %v1256 = vadd.f32 %v1139, %v1255
        %v1257 = vpop.f32.mrf.mxu0
        %v1258 = vadd.f32 %v1141, %v1257
        %1259 = vmatmul.bf16.gmra.mxu0 %v641
        %v1260 = vpop.f32.mrf.mxu0
        %v1261 = vadd.f32 %v1144, %v1260
        %v1262 = vpop.f32.mrf.mxu0
        %v1263 = vadd.f32 %v1146, %v1262
        %1264 = vmatmul.bf16.gmra.mxu0 %v642
        %v1265 = vpop.f32.mrf.mxu0
        %v1266 = vadd.f32 %v1149, %v1265
        %v1267 = vpop.f32.mrf.mxu0
        %v1268 = vadd.f32 %v1151, %v1267
        %1269 = vmatmul.bf16.gmra.mxu0 %v643
        %v1270 = vpop.f32.mrf.mxu0
        %v1271 = vadd.f32 %v1154, %v1270
        %v1272 = vpop.f32.mrf.mxu0
        %v1273 = vadd.f32 %v1156, %v1272
        %1274 = vmatmul.bf16.gmra.mxu0 %v644
        %v1275 = vpop.f32.mrf.mxu0
        %v1276 = vadd.f32 %v1159, %v1275
        %v1277 = vpop.f32.mrf.mxu0
        %v1278 = vadd.f32 %v1161, %v1277
        %1279 = vmatmul.bf16.gmra.mxu0 %v645
        %v1280 = vpop.f32.mrf.mxu0
        %v1281 = vadd.f32 %v1164, %v1280
        %v1282 = vpop.f32.mrf.mxu0
        %v1283 = vadd.f32 %v1166, %v1282
        %1284 = vmatmul.bf16.gmra.mxu0 %v646
        %v1285 = vpop.f32.mrf.mxu0
        %v1286 = vadd.f32 %v1169, %v1285
        %v1287 = vpop.f32.mrf.mxu0
        %v1288 = vadd.f32 %v1171, %v1287
        %1289 = vmatmul.bf16.gmra.mxu0 %v647
        %v1290 = vpop.f32.mrf.mxu0
        %v1291 = vadd.f32 %v1174, %v1290
        %v1292 = vpop.f32.mrf.mxu0
        %v1293 = vadd.f32 %v1176, %v1292
        %1294 = vmatmul.bf16.gmra.mxu0 %v648
        %v1295 = vpop.f32.mrf.mxu0
        %v1296 = vadd.f32 %v1179, %v1295
        %v1297 = vpop.f32.mrf.mxu0
        %v1298 = vadd.f32 %v1181, %v1297
        %1299 = vmatmul.bf16.gmra.mxu0 %v649
        %v1300 = vpop.f32.mrf.mxu0
        %v1301 = vadd.f32 %v1184, %v1300
        %v1302 = vpop.f32.mrf.mxu0
        %v1303 = vadd.f32 %v1186, %v1302
        %1304 = vdwg.mxu0
        %s1305 = scalar_lea.vmem [#allocation4], 448
        %v1306 = vld [vmem:[%s1305] sm:$0xf]
        %v1307 = vld [vmem:[%s1305 + $0x4] sm:$0xf]
        %v1308 = vld [vmem:[%s1305 + $0x8] sm:$0xf]
        %v1309 = vld [vmem:[%s1305 + $0xc] sm:$0xf]
        %v1310 = vld [vmem:[%s1305 + $0x10] sm:$0xf]
        %v1311 = vld [vmem:[%s1305 + $0x14] sm:$0xf]
        %v1312 = vld [vmem:[%s1305 + $0x18] sm:$0xf]
        %v1313 = vld [vmem:[%s1305 + $0x1c] sm:$0xf]
        %v1314 = vld [vmem:[%s1305 + $0x20] sm:$0xf]
        %v1315 = vld [vmem:[%s1305 + $0x24] sm:$0xf]
        %v1316 = vld [vmem:[%s1305 + $0x28] sm:$0xf]
        %v1317 = vld [vmem:[%s1305 + $0x2c] sm:$0xf]
        %v1318 = vld [vmem:[%s1305 + $0x30] sm:$0xf]
        %v1319 = vld [vmem:[%s1305 + $0x34] sm:$0xf]
        %v1320 = vld [vmem:[%s1305 + $0x38] sm:$0xf]
        %v1321 = vld [vmem:[%s1305 + $0x3c] sm:$0xf]
        %v1338 = vunpack.c.l.b16 %v1306
        %v1339 = vunpack.c.l.b16 %v1307
        %v1340 = vunpack.c.l.b16 %v1308
        %v1341 = vunpack.c.l.b16 %v1309
        %v1342 = vunpack.c.l.b16 %v1310
        %v1343 = vunpack.c.l.b16 %v1311
        %v1344 = vunpack.c.l.b16 %v1312
        %v1345 = vunpack.c.l.b16 %v1313
        %v1346 = vunpack.c.l.b16 %v1314
        %v1347 = vunpack.c.l.b16 %v1315
        %v1348 = vunpack.c.l.b16 %v1316
        %v1349 = vunpack.c.l.b16 %v1317
        %v1350 = vunpack.c.l.b16 %v1318
        %v1351 = vunpack.c.l.b16 %v1319
        %v1352 = vunpack.c.l.b16 %v1320
        %v1353 = vunpack.c.l.b16 %v1321
        %v1354 = vpack.c.b16 %v1339, %v1338
        %v1355 = vpack.c.b16 %v1341, %v1340
        %v1356 = vpack.c.b16 %v1343, %v1342
        %v1357 = vpack.c.b16 %v1345, %v1344
        %v1358 = vpack.c.b16 %v1347, %v1346
        %v1359 = vpack.c.b16 %v1349, %v1348
        %v1360 = vpack.c.b16 %v1351, %v1350
        %v1361 = vpack.c.b16 %v1353, %v1352
        %1370 = vmatpush.bf16.msra.mxu0 %v1361
        %1371 = vmatpush.bf16.msra.mxu0 %v1360
        %1372 = vmatpush.bf16.msra.mxu0 %v1359
        %1373 = vmatpush.bf16.msra.mxu0 %v1358
        %1374 = vmatpush.bf16.msra.mxu0 %v1357
        %1375 = vmatpush.bf16.msra.mxu0 %v1356
        %1376 = vmatpush.bf16.msra.mxu0 %v1355
        %1377 = vmatpush.bf16.msra.mxu0 %v1354
        %1378 = vmatmul.bf16.gmra.mxu0 %v872
        %v1379 = vpop.f32.mrf.mxu0
        %v1380 = vadd.f32 0.0, %v1379
        %v1381 = vpop.f32.mrf.mxu0
        %v1382 = vadd.f32 0.0, %v1381
        %1383 = vmatmul.bf16.gmra.mxu0 %v873
        %v1384 = vpop.f32.mrf.mxu0
        %v1385 = vadd.f32 0.0, %v1384
        %v1386 = vpop.f32.mrf.mxu0
        %v1387 = vadd.f32 0.0, %v1386
        %1388 = vmatmul.bf16.gmra.mxu0 %v874
        %v1389 = vpop.f32.mrf.mxu0
        %v1390 = vadd.f32 0.0, %v1389
        %v1391 = vpop.f32.mrf.mxu0
        %v1392 = vadd.f32 0.0, %v1391
        %1393 = vmatmul.bf16.gmra.mxu0 %v875
        %v1394 = vpop.f32.mrf.mxu0
        %v1395 = vadd.f32 0.0, %v1394
        %v1396 = vpop.f32.mrf.mxu0
        %v1397 = vadd.f32 0.0, %v1396
        %1398 = vmatmul.bf16.gmra.mxu0 %v876
        %v1399 = vpop.f32.mrf.mxu0
        %v1400 = vadd.f32 0.0, %v1399
        %v1401 = vpop.f32.mrf.mxu0
        %v1402 = vadd.f32 0.0, %v1401
        %1403 = vmatmul.bf16.gmra.mxu0 %v877
        %v1404 = vpop.f32.mrf.mxu0
        %v1405 = vadd.f32 0.0, %v1404
        %v1406 = vpop.f32.mrf.mxu0
        %v1407 = vadd.f32 0.0, %v1406
        %1408 = vmatmul.bf16.gmra.mxu0 %v878
        %v1409 = vpop.f32.mrf.mxu0
        %v1410 = vadd.f32 0.0, %v1409
        %v1411 = vpop.f32.mrf.mxu0
        %v1412 = vadd.f32 0.0, %v1411
        %1413 = vmatmul.bf16.gmra.mxu0 %v879
        %v1414 = vpop.f32.mrf.mxu0
        %v1415 = vadd.f32 0.0, %v1414
        %v1416 = vpop.f32.mrf.mxu0
        %v1417 = vadd.f32 0.0, %v1416
        %1418 = vmatmul.bf16.gmra.mxu0 %v880
        %v1419 = vpop.f32.mrf.mxu0
        %v1420 = vadd.f32 0.0, %v1419
        %v1421 = vpop.f32.mrf.mxu0
        %v1422 = vadd.f32 0.0, %v1421
        %1423 = vmatmul.bf16.gmra.mxu0 %v881
        %v1424 = vpop.f32.mrf.mxu0
        %v1425 = vadd.f32 0.0, %v1424
        %v1426 = vpop.f32.mrf.mxu0
        %v1427 = vadd.f32 0.0, %v1426
        %1428 = vmatmul.bf16.gmra.mxu0 %v882
        %v1429 = vpop.f32.mrf.mxu0
        %v1430 = vadd.f32 0.0, %v1429
        %v1431 = vpop.f32.mrf.mxu0
        %v1432 = vadd.f32 0.0, %v1431
        %1433 = vmatmul.bf16.gmra.mxu0 %v883
        %v1434 = vpop.f32.mrf.mxu0
        %v1435 = vadd.f32 0.0, %v1434
        %v1436 = vpop.f32.mrf.mxu0
        %v1437 = vadd.f32 0.0, %v1436
        %1438 = vdwg.mxu0
        %v1439 = vadd.f32 %v1246, %v1380
        %v1440 = vadd.f32 %v1248, %v1382
        %v1441 = vadd.f32 %v1251, %v1385
        %v1442 = vadd.f32 %v1253, %v1387
        %v1443 = vadd.f32 %v1256, %v1390
        %v1444 = vadd.f32 %v1258, %v1392
        %v1445 = vadd.f32 %v1261, %v1395
        %v1446 = vadd.f32 %v1263, %v1397
        %v1447 = vadd.f32 %v1266, %v1400
        %v1448 = vadd.f32 %v1268, %v1402
        %v1449 = vadd.f32 %v1271, %v1405
        %v1450 = vadd.f32 %v1273, %v1407
        %v1451 = vadd.f32 %v1276, %v1410
        %v1452 = vadd.f32 %v1278, %v1412
        %v1453 = vadd.f32 %v1281, %v1415
        %v1454 = vadd.f32 %v1283, %v1417
        %v1455 = vadd.f32 %v1286, %v1420
        %v1456 = vadd.f32 %v1288, %v1422
        %v1457 = vadd.f32 %v1291, %v1425
        %v1458 = vadd.f32 %v1293, %v1427
        %v1459 = vadd.f32 %v1296, %v1430
        %v1460 = vadd.f32 %v1298, %v1432
        %v1461 = vadd.f32 %v1301, %v1435
        %v1462 = vadd.f32 %v1303, %v1437
        %vm1487 = vcmask 1046528
        %v1488 = vrot.slane %v1439, 1
        %v1489 = vrot.slane %v1440, 1
        %v1490 = vsel %vm1487, %v1488, %v1489
        %v1491 = vrot.slane %v1441, 1
        %v1492 = vrot.slane %v1442, 1
        %v1493 = vsel %vm1487, %v1491, %v1492
        %v1494 = vrot.slane %v1443, 1
        %v1495 = vrot.slane %v1444, 1
        %v1496 = vsel %vm1487, %v1494, %v1495
        %v1497 = vrot.slane %v1445, 1
        %v1498 = vrot.slane %v1446, 1
        %v1499 = vsel %vm1487, %v1497, %v1498
        %v1500 = vrot.slane %v1447, 1
        %v1501 = vrot.slane %v1448, 1
        %v1502 = vsel %vm1487, %v1500, %v1501
        %v1503 = vrot.slane %v1449, 1
        %v1504 = vrot.slane %v1450, 1
        %v1505 = vsel %vm1487, %v1503, %v1504
        %v1506 = vrot.slane %v1451, 1
        %v1507 = vrot.slane %v1452, 1
        %v1508 = vsel %vm1487, %v1506, %v1507
        %v1509 = vrot.slane %v1453, 1
        %v1510 = vrot.slane %v1454, 1
        %v1511 = vsel %vm1487, %v1509, %v1510
        %v1512 = vrot.slane %v1455, 1
        %v1513 = vrot.slane %v1456, 1
        %v1514 = vsel %vm1487, %v1512, %v1513
        %v1515 = vrot.slane %v1457, 1
        %v1516 = vrot.slane %v1458, 1
        %v1517 = vsel %vm1487, %v1515, %v1516
        %v1518 = vrot.slane %v1459, 1
        %v1519 = vrot.slane %v1460, 1
        %v1520 = vsel %vm1487, %v1518, %v1519
        %v1521 = vrot.slane %v1461, 1
        %v1522 = vrot.slane %v1462, 1
        %v1523 = vsel %vm1487, %v1521, %v1522
        %v1548 = vadd.f32 %v1013, %v1490
        %v1549 = vadd.f32 %v1014, %v1489
        %v1550 = vadd.f32 %v1015, %v1493
        %v1551 = vadd.f32 %v1016, %v1492
        %v1552 = vadd.f32 %v1017, %v1496
        %v1553 = vadd.f32 %v1018, %v1495
        %v1554 = vadd.f32 %v1019, %v1499
        %v1555 = vadd.f32 %v1020, %v1498
        %v1556 = vadd.f32 %v1021, %v1502
        %v1557 = vadd.f32 %v1022, %v1501
        %v1558 = vadd.f32 %v1023, %v1505
        %v1559 = vadd.f32 %v1024, %v1504
        %v1560 = vadd.f32 %v1025, %v1508
        %v1561 = vadd.f32 %v1026, %v1507
        %v1562 = vadd.f32 %v1027, %v1511
        %v1563 = vadd.f32 %v1028, %v1510
        %v1564 = vadd.f32 %v1029, %v1514
        %v1565 = vadd.f32 %v1030, %v1513
        %v1566 = vadd.f32 %v1031, %v1517
        %v1567 = vadd.f32 %v1032, %v1516
        %v1568 = vadd.f32 %v1033, %v1520
        %v1569 = vadd.f32 %v1034, %v1519
        %v1570 = vadd.f32 %v1035, %v1523
        %v1571 = vadd.f32 %v1036, %v1522
        %s1572 = scalar_lea.vmem [#allocation4], 128
        %v1573 = vld [vmem:[%s1572] sm:$0xf]
        %v1574 = vld [vmem:[%s1572 + $0x4] sm:$0xf]
        %v1575 = vld [vmem:[%s1572 + $0x8] sm:$0xf]
        %v1576 = vld [vmem:[%s1572 + $0xc] sm:$0xf]
        %v1577 = vld [vmem:[%s1572 + $0x10] sm:$0xf]
        %v1578 = vld [vmem:[%s1572 + $0x14] sm:$0xf]
        %v1579 = vld [vmem:[%s1572 + $0x18] sm:$0xf]
        %v1580 = vld [vmem:[%s1572 + $0x1c] sm:$0xf]
        %v1581 = vld [vmem:[%s1572 + $0x20] sm:$0xf]
        %v1582 = vld [vmem:[%s1572 + $0x24] sm:$0xf]
        %v1583 = vld [vmem:[%s1572 + $0x28] sm:$0xf]
        %v1584 = vld [vmem:[%s1572 + $0x2c] sm:$0xf]
        %v1585 = vld [vmem:[%s1572 + $0x30] sm:$0xf]
        %v1586 = vld [vmem:[%s1572 + $0x34] sm:$0xf]
        %v1587 = vld [vmem:[%s1572 + $0x38] sm:$0xf]
        %v1588 = vld [vmem:[%s1572 + $0x3c] sm:$0xf]
        %s1589 = scalar_lea.vmem [#allocation4], 320
        %v1590 = vld [vmem:[%s1589] sm:$0xf]
        %v1591 = vld [vmem:[%s1589 + $0x4] sm:$0xf]
        %v1592 = vld [vmem:[%s1589 + $0x8] sm:$0xf]
        %v1593 = vld [vmem:[%s1589 + $0xc] sm:$0xf]
        %v1594 = vld [vmem:[%s1589 + $0x10] sm:$0xf]
        %v1595 = vld [vmem:[%s1589 + $0x14] sm:$0xf]
        %v1596 = vld [vmem:[%s1589 + $0x18] sm:$0xf]
        %v1597 = vld [vmem:[%s1589 + $0x1c] sm:$0xf]
        %v1598 = vld [vmem:[%s1589 + $0x20] sm:$0xf]
        %v1599 = vld [vmem:[%s1589 + $0x24] sm:$0xf]
        %v1600 = vld [vmem:[%s1589 + $0x28] sm:$0xf]
        %v1601 = vld [vmem:[%s1589 + $0x2c] sm:$0xf]
        %v1602 = vld [vmem:[%s1589 + $0x30] sm:$0xf]
        %v1603 = vld [vmem:[%s1589 + $0x34] sm:$0xf]
        %v1604 = vld [vmem:[%s1589 + $0x38] sm:$0xf]
        %v1605 = vld [vmem:[%s1589 + $0x3c] sm:$0xf]
        %v1622 = vunpack.c.l.b16 %v1590
        %v1623 = vunpack.c.l.b16 %v1591
        %v1624 = vunpack.c.l.b16 %v1592
        %v1625 = vunpack.c.l.b16 %v1593
        %v1626 = vunpack.c.l.b16 %v1594
        %v1627 = vunpack.c.l.b16 %v1595
        %v1628 = vunpack.c.l.b16 %v1596
        %v1629 = vunpack.c.l.b16 %v1597
        %v1630 = vunpack.c.l.b16 %v1598
        %v1631 = vunpack.c.l.b16 %v1599
        %v1632 = vunpack.c.l.b16 %v1600
        %v1633 = vunpack.c.l.b16 %v1601
        %v1634 = vunpack.c.l.b16 %v1602
        %v1635 = vunpack.c.l.b16 %v1603
        %v1636 = vunpack.c.l.b16 %v1604
        %v1637 = vunpack.c.l.b16 %v1605
        %v1638 = vpack.c.b16 %v1623, %v1622
        %v1639 = vpack.c.b16 %v1625, %v1624
        %v1640 = vpack.c.b16 %v1627, %v1626
        %v1641 = vpack.c.b16 %v1629, %v1628
        %v1642 = vpack.c.b16 %v1631, %v1630
        %v1643 = vpack.c.b16 %v1633, %v1632
        %v1644 = vpack.c.b16 %v1635, %v1634
        %v1645 = vpack.c.b16 %v1637, %v1636
        %1654 = vmatpush.bf16.msra.mxu0 %v1645
        %1655 = vmatpush.bf16.msra.mxu0 %v1644
        %1656 = vmatpush.bf16.msra.mxu0 %v1643
        %1657 = vmatpush.bf16.msra.mxu0 %v1642
        %1658 = vmatpush.bf16.msra.mxu0 %v1641
        %1659 = vmatpush.bf16.msra.mxu0 %v1640
        %1660 = vmatpush.bf16.msra.mxu0 %v1639
        %1661 = vmatpush.bf16.msra.mxu0 %v1638
        %1662 = vmatmul.bf16.gmra.mxu0 %v449
        %v1663 = vpop.f32.mrf.mxu0
        %v1664 = vadd.f32 0.0, %v1663
        %v1665 = vpop.f32.mrf.mxu0
        %v1666 = vadd.f32 0.0, %v1665
        %1667 = vmatmul.bf16.gmra.mxu0 %v450
        %v1668 = vpop.f32.mrf.mxu0
        %v1669 = vadd.f32 0.0, %v1668
        %v1670 = vpop.f32.mrf.mxu0
        %v1671 = vadd.f32 0.0, %v1670
        %1672 = vmatmul.bf16.gmra.mxu0 %v451
        %v1673 = vpop.f32.mrf.mxu0
        %v1674 = vadd.f32 0.0, %v1673
        %v1675 = vpop.f32.mrf.mxu0
        %v1676 = vadd.f32 0.0, %v1675
        %1677 = vmatmul.bf16.gmra.mxu0 %v452
        %v1678 = vpop.f32.mrf.mxu0
        %v1679 = vadd.f32 0.0, %v1678
        %v1680 = vpop.f32.mrf.mxu0
        %v1681 = vadd.f32 0.0, %v1680
        %1682 = vmatmul.bf16.gmra.mxu0 %v453
        %v1683 = vpop.f32.mrf.mxu0
        %v1684 = vadd.f32 0.0, %v1683
        %v1685 = vpop.f32.mrf.mxu0
        %v1686 = vadd.f32 0.0, %v1685
        %1687 = vmatmul.bf16.gmra.mxu0 %v454
        %v1688 = vpop.f32.mrf.mxu0
        %v1689 = vadd.f32 0.0, %v1688
        %v1690 = vpop.f32.mrf.mxu0
        %v1691 = vadd.f32 0.0, %v1690
        %1692 = vmatmul.bf16.gmra.mxu0 %v455
        %v1693 = vpop.f32.mrf.mxu0
        %v1694 = vadd.f32 0.0, %v1693
        %v1695 = vpop.f32.mrf.mxu0
        %v1696 = vadd.f32 0.0, %v1695
        %1697 = vmatmul.bf16.gmra.mxu0 %v456
        %v1698 = vpop.f32.mrf.mxu0
        %v1699 = vadd.f32 0.0, %v1698
        %v1700 = vpop.f32.mrf.mxu0
        %v1701 = vadd.f32 0.0, %v1700
        %1702 = vmatmul.bf16.gmra.mxu0 %v457
        %v1703 = vpop.f32.mrf.mxu0
        %v1704 = vadd.f32 0.0, %v1703
        %v1705 = vpop.f32.mrf.mxu0
        %v1706 = vadd.f32 0.0, %v1705
        %1707 = vmatmul.bf16.gmra.mxu0 %v458
        %v1708 = vpop.f32.mrf.mxu0
        %v1709 = vadd.f32 0.0, %v1708
        %v1710 = vpop.f32.mrf.mxu0
        %v1711 = vadd.f32 0.0, %v1710
        %1712 = vmatmul.bf16.gmra.mxu0 %v459
        %v1713 = vpop.f32.mrf.mxu0
        %v1714 = vadd.f32 0.0, %v1713
        %v1715 = vpop.f32.mrf.mxu0
        %v1716 = vadd.f32 0.0, %v1715
        %1717 = vmatmul.bf16.gmra.mxu0 %v460
        %v1718 = vpop.f32.mrf.mxu0
        %v1719 = vadd.f32 0.0, %v1718
        %v1720 = vpop.f32.mrf.mxu0
        %v1721 = vadd.f32 0.0, %v1720
        %1722 = vdwg.mxu0
        %v1739 = vunpack.c.l.b16 %v1573
        %v1740 = vunpack.c.l.b16 %v1574
        %v1741 = vunpack.c.l.b16 %v1575
        %v1742 = vunpack.c.l.b16 %v1576
        %v1743 = vunpack.c.l.b16 %v1577
        %v1744 = vunpack.c.l.b16 %v1578
        %v1745 = vunpack.c.l.b16 %v1579
        %v1746 = vunpack.c.l.b16 %v1580
        %v1747 = vunpack.c.l.b16 %v1581
        %v1748 = vunpack.c.l.b16 %v1582
        %v1749 = vunpack.c.l.b16 %v1583
        %v1750 = vunpack.c.l.b16 %v1584
        %v1751 = vunpack.c.l.b16 %v1585
        %v1752 = vunpack.c.l.b16 %v1586
        %v1753 = vunpack.c.l.b16 %v1587
        %v1754 = vunpack.c.l.b16 %v1588
        %v1755 = vpack.c.b16 %v1740, %v1739
        %v1756 = vpack.c.b16 %v1742, %v1741
        %v1757 = vpack.c.b16 %v1744, %v1743
        %v1758 = vpack.c.b16 %v1746, %v1745
        %v1759 = vpack.c.b16 %v1748, %v1747
        %v1760 = vpack.c.b16 %v1750, %v1749
        %v1761 = vpack.c.b16 %v1752, %v1751
        %v1762 = vpack.c.b16 %v1754, %v1753
        %1771 = vmatpush.bf16.msra.mxu0 %v1762
        %1772 = vmatpush.bf16.msra.mxu0 %v1761
        %1773 = vmatpush.bf16.msra.mxu0 %v1760
        %1774 = vmatpush.bf16.msra.mxu0 %v1759
        %1775 = vmatpush.bf16.msra.mxu0 %v1758
        %1776 = vmatpush.bf16.msra.mxu0 %v1757
        %1777 = vmatpush.bf16.msra.mxu0 %v1756
        %1778 = vmatpush.bf16.msra.mxu0 %v1755
        %1779 = vmatmul.bf16.gmra.mxu0 %v638
        %v1780 = vpop.f32.mrf.mxu0
        %v1781 = vadd.f32 %v1664, %v1780
        %v1782 = vpop.f32.mrf.mxu0
        %v1783 = vadd.f32 %v1666, %v1782
        %1784 = vmatmul.bf16.gmra.mxu0 %v639
        %v1785 = vpop.f32.mrf.mxu0
        %v1786 = vadd.f32 %v1669, %v1785
        %v1787 = vpop.f32.mrf.mxu0
        %v1788 = vadd.f32 %v1671, %v1787
        %1789 = vmatmul.bf16.gmra.mxu0 %v640
        %v1790 = vpop.f32.mrf.mxu0
        %v1791 = vadd.f32 %v1674, %v1790
        %v1792 = vpop.f32.mrf.mxu0
        %v1793 = vadd.f32 %v1676, %v1792
        %1794 = vmatmul.bf16.gmra.mxu0 %v641
        %v1795 = vpop.f32.mrf.mxu0
        %v1796 = vadd.f32 %v1679, %v1795
        %v1797 = vpop.f32.mrf.mxu0
        %v1798 = vadd.f32 %v1681, %v1797
        %1799 = vmatmul.bf16.gmra.mxu0 %v642
        %v1800 = vpop.f32.mrf.mxu0
        %v1801 = vadd.f32 %v1684, %v1800
        %v1802 = vpop.f32.mrf.mxu0
        %v1803 = vadd.f32 %v1686, %v1802
        %1804 = vmatmul.bf16.gmra.mxu0 %v643
        %v1805 = vpop.f32.mrf.mxu0
        %v1806 = vadd.f32 %v1689, %v1805
        %v1807 = vpop.f32.mrf.mxu0
        %v1808 = vadd.f32 %v1691, %v1807
        %1809 = vmatmul.bf16.gmra.mxu0 %v644
        %v1810 = vpop.f32.mrf.mxu0
        %v1811 = vadd.f32 %v1694, %v1810
        %v1812 = vpop.f32.mrf.mxu0
        %v1813 = vadd.f32 %v1696, %v1812
        %1814 = vmatmul.bf16.gmra.mxu0 %v645
        %v1815 = vpop.f32.mrf.mxu0
        %v1816 = vadd.f32 %v1699, %v1815
        %v1817 = vpop.f32.mrf.mxu0
        %v1818 = vadd.f32 %v1701, %v1817
        %1819 = vmatmul.bf16.gmra.mxu0 %v646
        %v1820 = vpop.f32.mrf.mxu0
        %v1821 = vadd.f32 %v1704, %v1820
        %v1822 = vpop.f32.mrf.mxu0
        %v1823 = vadd.f32 %v1706, %v1822
        %1824 = vmatmul.bf16.gmra.mxu0 %v647
        %v1825 = vpop.f32.mrf.mxu0
        %v1826 = vadd.f32 %v1709, %v1825
        %v1827 = vpop.f32.mrf.mxu0
        %v1828 = vadd.f32 %v1711, %v1827
        %1829 = vmatmul.bf16.gmra.mxu0 %v648
        %v1830 = vpop.f32.mrf.mxu0
        %v1831 = vadd.f32 %v1714, %v1830
        %v1832 = vpop.f32.mrf.mxu0
        %v1833 = vadd.f32 %v1716, %v1832
        %1834 = vmatmul.bf16.gmra.mxu0 %v649
        %v1835 = vpop.f32.mrf.mxu0
        %v1836 = vadd.f32 %v1719, %v1835
        %v1837 = vpop.f32.mrf.mxu0
        %v1838 = vadd.f32 %v1721, %v1837
        %1839 = vdwg.mxu0
        %s1840 = scalar_lea.vmem [#allocation4], 512
        %v1841 = vld [vmem:[%s1840] sm:$0xf]
        %v1842 = vld [vmem:[%s1840 + $0x4] sm:$0xf]
        %v1843 = vld [vmem:[%s1840 + $0x8] sm:$0xf]
        %v1844 = vld [vmem:[%s1840 + $0xc] sm:$0xf]
        %v1845 = vld [vmem:[%s1840 + $0x10] sm:$0xf]
        %v1846 = vld [vmem:[%s1840 + $0x14] sm:$0xf]
        %v1847 = vld [vmem:[%s1840 + $0x18] sm:$0xf]
        %v1848 = vld [vmem:[%s1840 + $0x1c] sm:$0xf]
        %v1849 = vld [vmem:[%s1840 + $0x20] sm:$0xf]
        %v1850 = vld [vmem:[%s1840 + $0x24] sm:$0xf]
        %v1851 = vld [vmem:[%s1840 + $0x28] sm:$0xf]
        %v1852 = vld [vmem:[%s1840 + $0x2c] sm:$0xf]
        %v1853 = vld [vmem:[%s1840 + $0x30] sm:$0xf]
        %v1854 = vld [vmem:[%s1840 + $0x34] sm:$0xf]
        %v1855 = vld [vmem:[%s1840 + $0x38] sm:$0xf]
        %v1856 = vld [vmem:[%s1840 + $0x3c] sm:$0xf]
        %v1873 = vunpack.c.l.b16 %v1841
        %v1874 = vunpack.c.l.b16 %v1842
        %v1875 = vunpack.c.l.b16 %v1843
        %v1876 = vunpack.c.l.b16 %v1844
        %v1877 = vunpack.c.l.b16 %v1845
        %v1878 = vunpack.c.l.b16 %v1846
        %v1879 = vunpack.c.l.b16 %v1847
        %v1880 = vunpack.c.l.b16 %v1848
        %v1881 = vunpack.c.l.b16 %v1849
        %v1882 = vunpack.c.l.b16 %v1850
        %v1883 = vunpack.c.l.b16 %v1851
        %v1884 = vunpack.c.l.b16 %v1852
        %v1885 = vunpack.c.l.b16 %v1853
        %v1886 = vunpack.c.l.b16 %v1854
        %v1887 = vunpack.c.l.b16 %v1855
        %v1888 = vunpack.c.l.b16 %v1856
        %v1889 = vpack.c.b16 %v1874, %v1873
        %v1890 = vpack.c.b16 %v1876, %v1875
        %v1891 = vpack.c.b16 %v1878, %v1877
        %v1892 = vpack.c.b16 %v1880, %v1879
        %v1893 = vpack.c.b16 %v1882, %v1881
        %v1894 = vpack.c.b16 %v1884, %v1883
        %v1895 = vpack.c.b16 %v1886, %v1885
        %v1896 = vpack.c.b16 %v1888, %v1887
        %1905 = vmatpush.bf16.msra.mxu0 %v1896
        %1906 = vmatpush.bf16.msra.mxu0 %v1895
        %1907 = vmatpush.bf16.msra.mxu0 %v1894
        %1908 = vmatpush.bf16.msra.mxu0 %v1893
        %1909 = vmatpush.bf16.msra.mxu0 %v1892
        %1910 = vmatpush.bf16.msra.mxu0 %v1891
        %1911 = vmatpush.bf16.msra.mxu0 %v1890
        %1912 = vmatpush.bf16.msra.mxu0 %v1889
        %1913 = vmatmul.bf16.gmra.mxu0 %v872
        %v1914 = vpop.f32.mrf.mxu0
        %v1915 = vadd.f32 0.0, %v1914
        %v1916 = vpop.f32.mrf.mxu0
        %v1917 = vadd.f32 0.0, %v1916
        %1918 = vmatmul.bf16.gmra.mxu0 %v873
        %v1919 = vpop.f32.mrf.mxu0
        %v1920 = vadd.f32 0.0, %v1919
        %v1921 = vpop.f32.mrf.mxu0
        %v1922 = vadd.f32 0.0, %v1921
        %1923 = vmatmul.bf16.gmra.mxu0 %v874
        %v1924 = vpop.f32.mrf.mxu0
        %v1925 = vadd.f32 0.0, %v1924
        %v1926 = vpop.f32.mrf.mxu0
        %v1927 = vadd.f32 0.0, %v1926
        %1928 = vmatmul.bf16.gmra.mxu0 %v875
        %v1929 = vpop.f32.mrf.mxu0
        %v1930 = vadd.f32 0.0, %v1929
        %v1931 = vpop.f32.mrf.mxu0
        %v1932 = vadd.f32 0.0, %v1931
        %1933 = vmatmul.bf16.gmra.mxu0 %v876
        %v1934 = vpop.f32.mrf.mxu0
        %v1935 = vadd.f32 0.0, %v1934
        %v1936 = vpop.f32.mrf.mxu0
        %v1937 = vadd.f32 0.0, %v1936
        %1938 = vmatmul.bf16.gmra.mxu0 %v877
        %v1939 = vpop.f32.mrf.mxu0
        %v1940 = vadd.f32 0.0, %v1939
        %v1941 = vpop.f32.mrf.mxu0
        %v1942 = vadd.f32 0.0, %v1941
        %1943 = vmatmul.bf16.gmra.mxu0 %v878
        %v1944 = vpop.f32.mrf.mxu0
        %v1945 = vadd.f32 0.0, %v1944
        %v1946 = vpop.f32.mrf.mxu0
        %v1947 = vadd.f32 0.0, %v1946
        %1948 = vmatmul.bf16.gmra.mxu0 %v879
        %v1949 = vpop.f32.mrf.mxu0
        %v1950 = vadd.f32 0.0, %v1949
        %v1951 = vpop.f32.mrf.mxu0
        %v1952 = vadd.f32 0.0, %v1951
        %1953 = vmatmul.bf16.gmra.mxu0 %v880
        %v1954 = vpop.f32.mrf.mxu0
        %v1955 = vadd.f32 0.0, %v1954
        %v1956 = vpop.f32.mrf.mxu0
        %v1957 = vadd.f32 0.0, %v1956
        %1958 = vmatmul.bf16.gmra.mxu0 %v881
        %v1959 = vpop.f32.mrf.mxu0
        %v1960 = vadd.f32 0.0, %v1959
        %v1961 = vpop.f32.mrf.mxu0
        %v1962 = vadd.f32 0.0, %v1961
        %1963 = vmatmul.bf16.gmra.mxu0 %v882
        %v1964 = vpop.f32.mrf.mxu0
        %v1965 = vadd.f32 0.0, %v1964
        %v1966 = vpop.f32.mrf.mxu0
        %v1967 = vadd.f32 0.0, %v1966
        %1968 = vmatmul.bf16.gmra.mxu0 %v883
        %v1969 = vpop.f32.mrf.mxu0
        %v1970 = vadd.f32 0.0, %v1969
        %v1971 = vpop.f32.mrf.mxu0
        %v1972 = vadd.f32 0.0, %v1971
        %1973 = vdwg.mxu0
        %v1974 = vadd.f32 %v1781, %v1915
        %v1975 = vadd.f32 %v1783, %v1917
        %v1976 = vadd.f32 %v1786, %v1920
        %v1977 = vadd.f32 %v1788, %v1922
        %v1978 = vadd.f32 %v1791, %v1925
        %v1979 = vadd.f32 %v1793, %v1927
        %v1980 = vadd.f32 %v1796, %v1930
        %v1981 = vadd.f32 %v1798, %v1932
        %v1982 = vadd.f32 %v1801, %v1935
        %v1983 = vadd.f32 %v1803, %v1937
        %v1984 = vadd.f32 %v1806, %v1940
        %v1985 = vadd.f32 %v1808, %v1942
        %v1986 = vadd.f32 %v1811, %v1945
        %v1987 = vadd.f32 %v1813, %v1947
        %v1988 = vadd.f32 %v1816, %v1950
        %v1989 = vadd.f32 %v1818, %v1952
        %v1990 = vadd.f32 %v1821, %v1955
        %v1991 = vadd.f32 %v1823, %v1957
        %v1992 = vadd.f32 %v1826, %v1960
        %v1993 = vadd.f32 %v1828, %v1962
        %v1994 = vadd.f32 %v1831, %v1965
        %v1995 = vadd.f32 %v1833, %v1967
        %v1996 = vadd.f32 %v1836, %v1970
        %v1997 = vadd.f32 %v1838, %v1972
        %vm2022 = vcmask 1045504
        %v2023 = vrot.slane %v1974, 2
        %v2024 = vrot.slane %v1975, 2
        %v2025 = vsel %vm2022, %v2023, %v2024
        %v2026 = vrot.slane %v1976, 2
        %v2027 = vrot.slane %v1977, 2
        %v2028 = vsel %vm2022, %v2026, %v2027
        %v2029 = vrot.slane %v1978, 2
        %v2030 = vrot.slane %v1979, 2
        %v2031 = vsel %vm2022, %v2029, %v2030
        %v2032 = vrot.slane %v1980, 2
        %v2033 = vrot.slane %v1981, 2
        %v2034 = vsel %vm2022, %v2032, %v2033
        %v2035 = vrot.slane %v1982, 2
        %v2036 = vrot.slane %v1983, 2
        %v2037 = vsel %vm2022, %v2035, %v2036
        %v2038 = vrot.slane %v1984, 2
        %v2039 = vrot.slane %v1985, 2
        %v2040 = vsel %vm2022, %v2038, %v2039
        %v2041 = vrot.slane %v1986, 2
        %v2042 = vrot.slane %v1987, 2
        %v2043 = vsel %vm2022, %v2041, %v2042
        %v2044 = vrot.slane %v1988, 2
        %v2045 = vrot.slane %v1989, 2
        %v2046 = vsel %vm2022, %v2044, %v2045
        %v2047 = vrot.slane %v1990, 2
        %v2048 = vrot.slane %v1991, 2
        %v2049 = vsel %vm2022, %v2047, %v2048
        %v2050 = vrot.slane %v1992, 2
        %v2051 = vrot.slane %v1993, 2
        %v2052 = vsel %vm2022, %v2050, %v2051
        %v2053 = vrot.slane %v1994, 2
        %v2054 = vrot.slane %v1995, 2
        %v2055 = vsel %vm2022, %v2053, %v2054
        %v2056 = vrot.slane %v1996, 2
        %v2057 = vrot.slane %v1997, 2
        %v2058 = vsel %vm2022, %v2056, %v2057
        %v2083 = vadd.f32 %v1548, %v2025
        %v2084 = vadd.f32 %v1549, %v2024
        %v2085 = vadd.f32 %v1550, %v2028
        %v2086 = vadd.f32 %v1551, %v2027
        %v2087 = vadd.f32 %v1552, %v2031
        %v2088 = vadd.f32 %v1553, %v2030
        %v2089 = vadd.f32 %v1554, %v2034
        %v2090 = vadd.f32 %v1555, %v2033
        %v2091 = vadd.f32 %v1556, %v2037
        %v2092 = vadd.f32 %v1557, %v2036
        %v2093 = vadd.f32 %v1558, %v2040
        %v2094 = vadd.f32 %v1559, %v2039
        %v2095 = vadd.f32 %v1560, %v2043
        %v2096 = vadd.f32 %v1561, %v2042
        %v2097 = vadd.f32 %v1562, %v2046
        %v2098 = vadd.f32 %v1563, %v2045
        %v2099 = vadd.f32 %v1564, %v2049
        %v2100 = vadd.f32 %v1565, %v2048
        %v2101 = vadd.f32 %v1566, %v2052
        %v2102 = vadd.f32 %v1567, %v2051
        %v2103 = vadd.f32 %v1568, %v2055
        %v2104 = vadd.f32 %v1569, %v2054
        %v2105 = vadd.f32 %v1570, %v2058
        %v2106 = vadd.f32 %v1571, %v2057
        %v2107 = vld [vmem:[%s294] sm:$0x1]
        %v2109 = vperm.slane %v2107, 0
        %v2111 = vmul.f32 %v2083, %v2109
        %v2112 = vmul.f32 %v2084, %v2109
        %v2113 = vmul.f32 %v2085, %v2109
        %v2114 = vmul.f32 %v2086, %v2109
        %v2115 = vmul.f32 %v2087, %v2109
        %v2116 = vmul.f32 %v2088, %v2109
        %v2117 = vmul.f32 %v2089, %v2109
        %v2118 = vmul.f32 %v2090, %v2109
        %v2119 = vmul.f32 %v2091, %v2109
        %v2120 = vmul.f32 %v2092, %v2109
        %v2121 = vmul.f32 %v2093, %v2109
        %v2122 = vmul.f32 %v2094, %v2109
        %v2123 = vmul.f32 %v2095, %v2109
        %v2124 = vmul.f32 %v2096, %v2109
        %v2125 = vmul.f32 %v2097, %v2109
        %v2126 = vmul.f32 %v2098, %v2109
        %v2127 = vmul.f32 %v2099, %v2109
        %v2128 = vmul.f32 %v2100, %v2109
        %v2129 = vmul.f32 %v2101, %v2109
        %v2130 = vmul.f32 %v2102, %v2109
        %v2131 = vmul.f32 %v2103, %v2109
        %v2132 = vmul.f32 %v2104, %v2109
        %v2133 = vmul.f32 %v2105, %v2109
        %v2134 = vmul.f32 %v2106, %v2109
        %v2135 = vld [vmem:[%s297] sm:$0x1]
        %v2137 = vperm.slane %v2135, 0
        %v2139 = vadd.f32 %v2111, %v2137
        %v2140 = vadd.f32 %v2112, %v2137
        %v2141 = vadd.f32 %v2113, %v2137
        %v2142 = vadd.f32 %v2114, %v2137
        %v2143 = vadd.f32 %v2115, %v2137
        %v2144 = vadd.f32 %v2116, %v2137
        %v2145 = vadd.f32 %v2117, %v2137
        %v2146 = vadd.f32 %v2118, %v2137
        %v2147 = vadd.f32 %v2119, %v2137
        %v2148 = vadd.f32 %v2120, %v2137
        %v2149 = vadd.f32 %v2121, %v2137
        %v2150 = vadd.f32 %v2122, %v2137
        %v2151 = vadd.f32 %v2123, %v2137
        %v2152 = vadd.f32 %v2124, %v2137
        %v2153 = vadd.f32 %v2125, %v2137
        %v2154 = vadd.f32 %v2126, %v2137
        %v2155 = vadd.f32 %v2127, %v2137
        %v2156 = vadd.f32 %v2128, %v2137
        %v2157 = vadd.f32 %v2129, %v2137
        %v2158 = vadd.f32 %v2130, %v2137
        %v2159 = vadd.f32 %v2131, %v2137
        %v2160 = vadd.f32 %v2132, %v2137
        %v2161 = vadd.f32 %v2133, %v2137
        %v2162 = vadd.f32 %v2134, %v2137
        %vm2163 = vcmp.gt.f32.partialorder %v2139, 0.0
        %vm2164 = vcmp.gt.f32.partialorder %v2140, 0.0
        %vm2165 = vcmp.gt.f32.partialorder %v2141, 0.0
        %vm2166 = vcmp.gt.f32.partialorder %v2142, 0.0
        %vm2167 = vcmp.gt.f32.partialorder %v2143, 0.0
        %vm2168 = vcmp.gt.f32.partialorder %v2144, 0.0
        %vm2169 = vcmp.gt.f32.partialorder %v2145, 0.0
        %vm2170 = vcmp.gt.f32.partialorder %v2146, 0.0
        %vm2171 = vcmp.gt.f32.partialorder %v2147, 0.0
        %vm2172 = vcmp.gt.f32.partialorder %v2148, 0.0
        %vm2173 = vcmp.gt.f32.partialorder %v2149, 0.0
        %vm2174 = vcmp.gt.f32.partialorder %v2150, 0.0
        %vm2175 = vcmp.gt.f32.partialorder %v2151, 0.0
        %vm2176 = vcmp.gt.f32.partialorder %v2152, 0.0
        %vm2177 = vcmp.gt.f32.partialorder %v2153, 0.0
        %vm2178 = vcmp.gt.f32.partialorder %v2154, 0.0
        %vm2179 = vcmp.gt.f32.partialorder %v2155, 0.0
        %vm2180 = vcmp.gt.f32.partialorder %v2156, 0.0
        %vm2181 = vcmp.gt.f32.partialorder %v2157, 0.0
        %vm2182 = vcmp.gt.f32.partialorder %v2158, 0.0
        %vm2183 = vcmp.gt.f32.partialorder %v2159, 0.0
        %vm2184 = vcmp.gt.f32.partialorder %v2160, 0.0
        %vm2185 = vcmp.gt.f32.partialorder %v2161, 0.0
        %vm2186 = vcmp.gt.f32.partialorder %v2162, 0.0
        %v2187 = vmul.f32 %v2139, 0.1
        %v2188 = vmul.f32 %v2140, 0.1
        %v2189 = vmul.f32 %v2141, 0.1
        %v2190 = vmul.f32 %v2142, 0.1
        %v2191 = vmul.f32 %v2143, 0.1
        %v2192 = vmul.f32 %v2144, 0.1
        %v2193 = vmul.f32 %v2145, 0.1
        %v2194 = vmul.f32 %v2146, 0.1
        %v2195 = vmul.f32 %v2147, 0.1
        %v2196 = vmul.f32 %v2148, 0.1
        %v2197 = vmul.f32 %v2149, 0.1
        %v2198 = vmul.f32 %v2150, 0.1
        %v2199 = vmul.f32 %v2151, 0.1
        %v2200 = vmul.f32 %v2152, 0.1
        %v2201 = vmul.f32 %v2153, 0.1
        %v2202 = vmul.f32 %v2154, 0.1
        %v2203 = vmul.f32 %v2155, 0.1
        %v2204 = vmul.f32 %v2156, 0.1
        %v2205 = vmul.f32 %v2157, 0.1
        %v2206 = vmul.f32 %v2158, 0.1
        %v2207 = vmul.f32 %v2159, 0.1
        %v2208 = vmul.f32 %v2160, 0.1
        %v2209 = vmul.f32 %v2161, 0.1
        %v2210 = vmul.f32 %v2162, 0.1
        %v2211 = vsel %vm2163, %v2139, %v2187
        %v2212 = vsel %vm2164, %v2140, %v2188
        %v2213 = vsel %vm2165, %v2141, %v2189
        %v2214 = vsel %vm2166, %v2142, %v2190
        %v2215 = vsel %vm2167, %v2143, %v2191
        %v2216 = vsel %vm2168, %v2144, %v2192
        %v2217 = vsel %vm2169, %v2145, %v2193
        %v2218 = vsel %vm2170, %v2146, %v2194
        %v2219 = vsel %vm2171, %v2147, %v2195
        %v2220 = vsel %vm2172, %v2148, %v2196
        %v2221 = vsel %vm2173, %v2149, %v2197
        %v2222 = vsel %vm2174, %v2150, %v2198
        %v2223 = vsel %vm2175, %v2151, %v2199
        %v2224 = vsel %vm2176, %v2152, %v2200
        %v2225 = vsel %vm2177, %v2153, %v2201
        %v2226 = vsel %vm2178, %v2154, %v2202
        %v2227 = vsel %vm2179, %v2155, %v2203
        %v2228 = vsel %vm2180, %v2156, %v2204
        %v2229 = vsel %vm2181, %v2157, %v2205
        %v2230 = vsel %vm2182, %v2158, %v2206
        %v2231 = vsel %vm2183, %v2159, %v2207
        %v2232 = vsel %vm2184, %v2160, %v2208
        %v2233 = vsel %vm2185, %v2161, %v2209
        %v2234 = vsel %vm2186, %v2162, %v2210
        %v2235 = vpack.c.bf16 %v2211, %v2211
        %v2236 = vpack.c.bf16 %v2212, %v2212
        %v2237 = vpack.c.bf16 %v2213, %v2213
        %v2238 = vpack.c.bf16 %v2214, %v2214
        %v2239 = vpack.c.bf16 %v2215, %v2215
        %v2240 = vpack.c.bf16 %v2216, %v2216
        %v2241 = vpack.c.bf16 %v2217, %v2217
        %v2242 = vpack.c.bf16 %v2218, %v2218
        %v2243 = vpack.c.bf16 %v2219, %v2219
        %v2244 = vpack.c.bf16 %v2220, %v2220
        %v2245 = vpack.c.bf16 %v2221, %v2221
        %v2246 = vpack.c.bf16 %v2222, %v2222
        %v2247 = vpack.c.bf16 %v2223, %v2223
        %v2248 = vpack.c.bf16 %v2224, %v2224
        %v2249 = vpack.c.bf16 %v2225, %v2225
        %v2250 = vpack.c.bf16 %v2226, %v2226
        %v2251 = vpack.c.bf16 %v2227, %v2227
        %v2252 = vpack.c.bf16 %v2228, %v2228
        %v2253 = vpack.c.bf16 %v2229, %v2229
        %v2254 = vpack.c.bf16 %v2230, %v2230
        %v2255 = vpack.c.bf16 %v2231, %v2231
        %v2256 = vpack.c.bf16 %v2232, %v2232
        %v2257 = vpack.c.bf16 %v2233, %v2233
        %v2258 = vpack.c.bf16 %v2234, %v2234
        %2259 = vst [vmem:[%s310] sm:$0xf] %v2235
        %2260 = vst [vmem:[%s310 + $0x4] sm:$0x3] %v2236
        %2261 = vst [vmem:[%s310 + $0x8] sm:$0xf] %v2237
        %2262 = vst [vmem:[%s310 + $0xc] sm:$0x3] %v2238
        %2263 = vst [vmem:[%s310 + $0x10] sm:$0xf] %v2239
        %2264 = vst [vmem:[%s310 + $0x14] sm:$0x3] %v2240
        %2265 = vst [vmem:[%s310 + $0x18] sm:$0xf] %v2241
        %2266 = vst [vmem:[%s310 + $0x1c] sm:$0x3] %v2242
        %2267 = vst [vmem:[%s310 + $0x20] sm:$0xf] %v2243
        %2268 = vst [vmem:[%s310 + $0x24] sm:$0x3] %v2244
        %2269 = vst [vmem:[%s310 + $0x28] sm:$0xf] %v2245
        %2270 = vst [vmem:[%s310 + $0x2c] sm:$0x3] %v2246
        %2271 = vst [vmem:[%s310 + $0x30] sm:$0xf] %v2247
        %2272 = vst [vmem:[%s310 + $0x34] sm:$0x3] %v2248
        %2273 = vst [vmem:[%s310 + $0x38] sm:$0xf] %v2249
        %2274 = vst [vmem:[%s310 + $0x3c] sm:$0x3] %v2250
        %2275 = vst [vmem:[%s310 + $0x40] sm:$0xf] %v2251
        %2276 = vst [vmem:[%s310 + $0x44] sm:$0x3] %v2252
        %2277 = vst [vmem:[%s310 + $0x48] sm:$0xf] %v2253
        %2278 = vst [vmem:[%s310 + $0x4c] sm:$0x3] %v2254
        %2279 = vst [vmem:[%s310 + $0x50] sm:$0xf] %v2255
        %2280 = vst [vmem:[%s310 + $0x54] sm:$0x3] %v2256
        %2281 = vst [vmem:[%s310 + $0x58] sm:$0xf] %v2257
        %2282 = vst [vmem:[%s310 + $0x5c] sm:$0x3] %v2258
        %s2283 = smul.u32 12, %s26
        %p2284 = scmp.lt.s32.totalorder %s24, 1
        %s2285 = scalar_select %p2284, %s24, 1
        %p2286 = scmp.lt.s32.totalorder %s2283, 11
        %s2287 = scalar_select %p2286, %s2283, 11
        %p2288 = scmp.lt.s32.totalorder %s25, 0
        %s2289 = scalar_select %p2288, %s25, 0
        %s2290 = smul.addr %s2287, 2
        %s2291 = sadd.s32 %s2289, %s2290
        %s2292 = smul.addr %s2285, 24
        %s2293 = sadd.s32 %s2291, %s2292
        %s2294 = smul.addr %s2293, 4
        %s2295 = scalar_lea.vmem %s4, %s2294
        // Predicated region
        $region45: #{tpu_custom_call.1} parent=35 // pred_check
          %p2296 = pneg %p164
        $region46: #{tpu_custom_call.1} parent=35 // pred_check_branch
          %2298 = sbr.rel (%p2296) target = $region48
        $region47: #{tpu_custom_call.1} parent=35 // pred_region
          %s2299 = smul.u32 12, %s26
        $region48: #{tpu_custom_call.1} parent=35 // pred_fallthru
          _
      $region36: #{tpu_custom_call.1} parent=5 // pred_fallthru
        _
      %p2300 = scmp.le.s32.totalorder 2, %s14
      // Predicated region
      $region49: #{tpu_custom_call.1} parent=5 // pred_check
        %p2301 = pneg %p2300
      $region50: #{tpu_custom_call.1} parent=5 // pred_check_branch
        %2303 = sbr.rel (%p2301) target = $region52
      $region51: #{tpu_custom_call.1} parent=5 // pred_region
        %s2304 = ssub.s32 %s14, 2
        // Predicated region
        $region53: #{tpu_custom_call.1} parent=51 // pred_check
          %p2305 = pneg %p170
        $region54: #{tpu_custom_call.1} parent=51 // pred_check_branch
          %2307 = sbr.rel (%p2305) target = $region56
        $region55: #{tpu_custom_call.1} parent=51 // pred_region
          %s2308 = smul.u32 12, %s29
          %p2309 = scmp.lt.s32.totalorder %s27, 1
          %s2310 = scalar_select %p2309, %s27, 1
          %p2311 = scmp.lt.s32.totalorder %s2308, 11
          %s2312 = scalar_select %p2311, %s2308, 11
          %p2313 = scmp.lt.s32.totalorder %s28, 0
          %s2314 = scalar_select %p2313, %s28, 0
          %s2315 = smul.addr %s2312, 2
          %s2316 = sadd.s32 %s2314, %s2315
          %s2317 = smul.addr %s2310, 24
          %s2318 = sadd.s32 %s2316, %s2317
          %s2319 = smul.addr %s2318, 4
          %s2320 = scalar_lea.vmem %s4, %s2319
        $region56: #{tpu_custom_call.1} parent=51 // pred_fallthru
          _
      $region52: #{tpu_custom_call.1} parent=5 // pred_fallthru
        _
    $region6: #{tpu_custom_call.1} parent=1 // loop_footer
      %s18 = sadd.s32 1, %s14
    $region7: #{tpu_custom_call.1} parent=1 // loop_footer_branch
      %13 = sbr.rel target = $region3
    $region8: #{tpu_custom_call.1} parent=1 // loop_exit
      _
    %2321 = vsyncpa [#allocation3], 1
    %s2322 = scalar_lea.sflag [#allocation3], 1
    %2323 = vsyncpa %s2322, 1
    %2324 = vsyncpa [#allocation5], 1

</llo_original>
